<compile_context>
chip_gen: v7x
topology: tpu7x:2x2x1
jax: 0.10.0
libtpu: 0.0.40
codegen_flags: <defaults>
</compile_context>

<pallas_src>
import jax
import jax.numpy as jnp
from jax.experimental import pallas as pl
from jax.experimental.pallas import tpu as pltpu


# ----------------------------------------------------------------------------
# Fused bottleneck kernel (Nb lane-packed images per grid step)
# ----------------------------------------------------------------------------
def _make_bottleneck_kernel(*, H, W, HW, L, stride, out_planes, is_last):
    def lane_row_col():
        # Per-lane (row, col) within each packed image, computed in-kernel with
        # f32 math (+0.5 guard keeps floor/divide exact) -- no mask-table DMA.
        lane = jax.lax.broadcasted_iota(jnp.int32, (1, L), 1).astype(jnp.float32)
        img = jnp.floor((lane + 0.5) / HW)
        p = lane - img * HW
        r = jnp.floor((p + 0.5) / W)
        c = p - r * W
        return r, c

    def dwconv3x3(x, taps):
        # x: (C, L) f32 channel-major, batch packed along lanes; taps: (C, 9) f32
        # (BN scale pre-folded).  Shifted taps = lane rotations (XLU); per-lane
        # boundary masks zero the halo AND any roll bleed across packed images.
        r, c = lane_row_col()
        row_ok = {-1: r >= 1.0, 0: None, 1: r <= float(H - 2)}
        col_ok = {-1: c >= 1.0, 0: None, 1: c <= float(W - 2)}
        acc = None
        t = 0
        for ky in (-1, 0, 1):
            for kx in (-1, 0, 1):
                s = ky * W + kx
                shifted = x if s == 0 else pltpu.roll(x, (-s) % L, 1)
                conds = [m for m in (row_ok[ky], col_ok[kx]) if m is not None]
                if conds:
                    mask = conds[0] if len(conds) == 1 else conds[0] & conds[1]
                    shifted = shifted * mask.astype(jnp.float32)
                term = shifted * taps[:, t:t + 1]
                acc = term if acc is None else acc + term
                t += 1
        return acc

    def kernel(*refs):
        if stride == 2:
            (x_ref, w1_ref, b12_ref, w2_ref, w3_ref, b3_ref,
             sel_ref, pool_ref) = refs[:8]
            out_refs = refs[8:]
        else:
            (x_ref, w1_ref, b12_ref, w2_ref, w3_ref, b3_ref) = refs[:6]
            out_refs = refs[6:]

        x_bf = x_ref[0]                                  # (Cin, L) bf16
        b12 = b12_ref[...]                               # (mid, 2) f32
        b1, b2 = b12[:, 0:1], b12[:, 1:2]

        # conv1 (grouped 1x1; BN scale + channel shuffle folded into rows) + bias + ReLU
        y1 = jnp.dot(w1_ref[...], x_bf, preferred_element_type=jnp.float32)
        y1 = jnp.maximum(y1 + b1, 0.0)                   # (mid, L) f32

        # conv2: 3x3 depthwise via masked lane rolls (BN scale folded into taps) + ReLU
        y2 = jnp.maximum(dwconv3x3(y1, w2_ref[...]) + b2, 0.0)
        y2_bf = y2.astype(jnp.bfloat16)

        if stride == 2:
            # stride-2 selection as ONE MXU matmul vs a 0/1 block-diagonal selector
            y2_bf = jnp.dot(y2_bf, sel_ref[...],
                            preferred_element_type=jnp.float32).astype(jnp.bfloat16)

        # conv3 (grouped 1x1; BN scale folded) + bias (no ReLU yet)
        y3 = jnp.dot(w3_ref[...], y2_bf, preferred_element_type=jnp.float32) + b3_ref[...]

        if stride == 2:
            # shortcut AvgPool2d(3, stride=2, padding=1), count_include_pad=True:
            # ONE MXU matmul (0/1 window-sum fused with stride-2 selection), /9 after.
            pooled = jnp.dot(x_bf, pool_ref[...],
                             preferred_element_type=jnp.float32) * (1.0 / 9.0)
            if is_last:
                out_ref, pre_ref = out_refs
                pre_ref[0, :out_planes, :] = y3
                pre_ref[0, out_planes:, :] = pooled
            else:
                (out_ref,) = out_refs
            # concat == disjoint channel ranges; ReLU fused; lane-dense stores
            out_ref[0, :out_planes, :] = jnp.maximum(y3, 0.0)
            out_ref[0, out_planes:, :] = jnp.maximum(pooled, 0.0)
        else:
            pre = y3 + x_bf.astype(jnp.float32)          # identity shortcut (Cin == out)
            if is_last:
                out_ref, pre_ref = out_refs
                pre_ref[0] = pre
            else:
                (out_ref,) = out_refs
            out_ref[0] = jnp.maximum(pre, 0.0)

    return kernel


# ----------------------------------------------------------------------------
# Host-side constant tables (tiny; built once per call)
# ----------------------------------------------------------------------------
def _make_sel_matrix(H, W):
    # (HW, HoWo) 0/1 matrix selecting even rows/cols (conv 3x3, stride 2, pad 1 centers)
    Ho, Wo = H // 2, W // 2
    p = jnp.arange(H * W)
    q = jnp.arange(Ho * Wo)
    src = 2 * (q // Wo) * W + 2 * (q % Wo)
    return (p[:, None] == src[None, :]).astype(jnp.float32)


def _make_pool_matrix(H, W):
    # (HW, HoWo) 0/1 matrix summing each 3x3 window centered at even (r, c);
    # the 1/9 division happens in-kernel (AvgPool2d(3,2,1), count_include_pad=True).
    Ho, Wo = H // 2, W // 2
    r = jnp.arange(H * W) // W
    c = jnp.arange(H * W) % W
    qr = 2 * (jnp.arange(Ho * Wo) // Wo)
    qc = 2 * (jnp.arange(Ho * Wo) % Wo)
    win = ((jnp.abs(r[:, None] - qr[None, :]) <= 1) &
           (jnp.abs(c[:, None] - qc[None, :]) <= 1))
    return win.astype(jnp.float32)


def _block_diag(mat, n):
    # kron(I_n, mat): per-image matrix -> block-diagonal over the packed lane axis
    return jnp.kron(jnp.eye(n, dtype=mat.dtype), mat)


def _choose_images_per_step(N, Cin, Cf, HW, HoWo, stride, is_last):
    """Pick Nb = images packed along the lane axis per grid step.

    Amortizes per-step overhead and makes stores lane-dense while (a) keeping the
    double-buffered I/O + selector tables under a VMEM budget that also fits
    v7x's 64 MiB, and (b) keeping >= 2 grid steps when the batch allows it so
    both v7x TensorCores get work (irrelevant but harmless on v5e/v6e)."""
    budget = 20 << 20

    def vmem_bytes(nb):
        io = 2 * (nb * Cin * HW * 2 + nb * Cf * HoWo * 4 * (2 if is_last else 1))
        tables = 2 * (nb * HW) * (nb * HoWo) * 2 if stride == 2 else 0
        return io + tables

    divisors = [d for d in range(1, N + 1) if N % d == 0]
    fit = [d for d in divisors if vmem_bytes(d) <= budget and d * HW <= 4096]
    if not fit:
        return 1
    nb = fit[-1]
    if N // nb < 2:
        keep_two = [d for d in fit if N // d >= 2]
        if keep_two:
            nb = keep_two[-1]
    return nb


# ----------------------------------------------------------------------------
# Parameter construction (deterministic synthetic weights; BN folded, shuffle folded)
# ----------------------------------------------------------------------------
def _grouped_pointwise_to_dense(w, groups):
    # w: (Cout, Cin_per_group) -> dense block-diagonal (Cout, Cin)
    Cout, Cin_g = w.shape
    Cout_g = Cout // groups
    Cin = Cin_g * groups
    dense = jnp.zeros((Cout, Cin), w.dtype)
    for gi in range(groups):
        dense = dense.at[gi * Cout_g:(gi + 1) * Cout_g,
                         gi * Cin_g:(gi + 1) * Cin_g].set(
            w[gi * Cout_g:(gi + 1) * Cout_g, :])
    return dense


def _bn_fold(key, c, eps=1e-5):
    k1, k2, k3, k4 = jax.random.split(key, 4)
    gamma = 1.0 + 0.1 * jax.random.normal(k1, (c,), jnp.float32)
    beta = 0.1 * jax.random.normal(k2, (c,), jnp.float32)
    running_mean = 0.1 * jax.random.normal(k3, (c,), jnp.float32)
    running_var = 1.0 + 0.1 * jnp.abs(jax.random.normal(k4, (c,), jnp.float32))
    scale = gamma / jnp.sqrt(running_var + eps)
    bias = beta - running_mean * scale
    return scale, bias


def init_bottleneck_params(key, in_planes, out_planes, groups):
    mid = out_planes // 4
    g1 = 1 if in_planes == 24 else groups
    keys = jax.random.split(key, 6)

    # conv1 (grouped 1x1) -> dense block-diagonal, BN1 scale folded, shuffle folded
    w1 = _grouped_pointwise_to_dense(
        0.1 * jax.random.normal(keys[0], (mid, in_planes // g1), jnp.float32), g1)
    s1, b1 = _bn_fold(keys[1], mid)
    w1 = w1 * s1[:, None]
    perm = jnp.arange(mid).reshape(g1, mid // g1).T.reshape(-1)   # ShuffleBlock(g1)
    w1, b1 = w1[perm, :], b1[perm]

    # conv2 depthwise 3x3 -> (mid, 9) taps, BN2 scale folded (stays f32 for the VPU)
    w2 = 0.1 * jax.random.normal(keys[2], (mid, 3, 3), jnp.float32).reshape(mid, 9)
    s2, b2 = _bn_fold(keys[3], mid)
    w2 = w2 * s2[:, None]

    # conv3 (grouped 1x1) -> dense block-diagonal, BN3 scale folded
    w3 = _grouped_pointwise_to_dense(
        0.1 * jax.random.normal(keys[4], (out_planes, mid // groups), jnp.float32),
        groups)
    s3, b3 = _bn_fold(keys[5], out_planes)
    w3 = w3 * s3[:, None]

    return dict(
        w1=w1.astype(jnp.bfloat16),          # MXU operand
        w2=w2,                               # f32 taps (VPU)
        w3=w3.astype(jnp.bfloat16),          # MXU operand
        b12=jnp.stack([b1, b2], axis=1),     # (mid, 2) f32 packed biases
        b3=b3[:, None],                      # (out_planes, 1) f32
    )


# ----------------------------------------------------------------------------
# Bottleneck forward (matches the PyTorch module's forward, NCHW in / NCHW out)
# ----------------------------------------------------------------------------
def bottleneck_forward(x_nchw, params, *, stride, groups, is_last=False,
                       images_per_step=None):
    del groups  # grouping already baked into the block-diagonal dense weights
    N, Cin, H, W = x_nchw.shape
    HW = H * W
    Ho, Wo = (H // 2, W // 2) if stride == 2 else (H, W)
    HoWo = Ho * Wo
    mid = params["w2"].shape[0]
    out_planes = params["w3"].shape[0]
    Cf = out_planes + (Cin if stride == 2 else 0)

    Nb = images_per_step or _choose_images_per_step(N, Cin, Cf, HW, HoWo,
                                                    stride, is_last)
    assert N % Nb == 0
    G = N // Nb
    L, Lo = Nb * HW, Nb * HoWo

    # Pack Nb images along the lane axis: (N,C,H,W) -> (G, Cin, Nb*HW); bf16 HBM I/O.
    xp = (x_nchw.reshape(G, Nb, Cin, HW)
                 .transpose(0, 2, 1, 3)
                 .reshape(G, Cin, L)
                 .astype(jnp.bfloat16))

    args = [xp, params["w1"], params["b12"], params["w2"], params["w3"], params["b3"]]
    in_specs = [
        pl.BlockSpec((1, Cin, L), lambda g: (g, 0, 0)),
        pl.BlockSpec((mid, Cin), lambda g: (0, 0)),
        pl.BlockSpec((mid, 2), lambda g: (0, 0)),
        pl.BlockSpec((mid, 9), lambda g: (0, 0)),
        pl.BlockSpec((out_planes, mid), lambda g: (0, 0)),
        pl.BlockSpec((out_planes, 1), lambda g: (0, 0)),
    ]
    if stride == 2:
        sel = _block_diag(_make_sel_matrix(H, W), Nb).astype(jnp.bfloat16)
        pool = _block_diag(_make_pool_matrix(H, W), Nb).astype(jnp.bfloat16)
        args += [sel, pool]
        in_specs += [pl.BlockSpec((L, Lo), lambda g: (0, 0)),
                     pl.BlockSpec((L, Lo), lambda g: (0, 0))]

    out_spec = pl.BlockSpec((1, Cf, Lo), lambda g: (g, 0, 0))
    out_sds = jax.ShapeDtypeStruct((G, Cf, Lo), jnp.float32)
    if is_last:
        out_shape, out_specs = (out_sds, out_sds), (out_spec, out_spec)
    else:
        out_shape, out_specs = out_sds, out_spec

    kernel = _make_bottleneck_kernel(H=H, W=W, HW=HW, L=L, stride=stride,
                                     out_planes=out_planes, is_last=is_last)
    result = pl.pallas_call(
        kernel,
        out_shape=out_shape,
        grid=(G,),
        in_specs=in_specs,
        out_specs=out_specs,
        compiler_params=pltpu.CompilerParams(
            dimension_semantics=("parallel",),
            vmem_limit_bytes=48 * 1024 * 1024),
    )(*args)

    def unpack(y):
        return (y.reshape(G, Cf, Nb, HoWo)
                 .transpose(0, 2, 1, 3)
                 .reshape(N, Cf, Ho, Wo))

    if is_last:
        out, pre = result
        return unpack(out), unpack(pre)
    return unpack(result)


# ----------------------------------------------------------------------------
if __name__ == "__main__":
    key = jax.random.PRNGKey(0)
    k_x, k_p1, k_p2 = jax.random.split(key, 3)

    # NCHW input: batch=8 (so lane-packing + >=2 grid steps kick in), 16 ch, 16x16
    x = jax.random.normal(k_x, (8, 16, 16, 16), jnp.float32)

    # stride=1 block: in=16, out=16, groups=2  (identity-add path)
    p1 = init_bottleneck_params(k_p1, in_planes=16, out_planes=16, groups=2)
    out1 = bottleneck_forward(x, p1, stride=1, groups=2, is_last=False)

    # stride=2 block: in=16, out=32, groups=2  (avgpool shortcut + concat path)
    p2 = init_bottleneck_params(k_p2, in_planes=16, out_planes=32, groups=2)
    out2, pre2 = bottleneck_forward(x, p2, stride=2, groups=2, is_last=True)

    jax.block_until_ready((out1, out2, pre2))
    assert out1.shape == (8, 16, 16, 16)
    assert out2.shape == (8, 48, 8, 8) and pre2.shape == (8, 48, 8, 8)
    assert bool(jnp.all(out1 >= 0)) and bool(jnp.all(out2 >= 0))
    assert bool(jnp.all(out2 == jnp.maximum(pre2, 0)))   # out == relu(preact)
    print("KERNEL_OK")
</pallas_src>

<mosaic_0001>
module attributes {stable_mosaic.version = 11 : i64} {
  func.func @kernel(%arg0: i32, %arg1: memref<1x16x1024xbf16, #tpu.memory_space<vmem>>, %arg2: memref<4x16xbf16, #tpu.memory_space<vmem>>, %arg3: memref<4x2xf32, #tpu.memory_space<vmem>>, %arg4: memref<4x9xf32, #tpu.memory_space<vmem>>, %arg5: memref<16x4xbf16, #tpu.memory_space<vmem>>, %arg6: memref<16x1xf32, #tpu.memory_space<vmem>>, %arg7: memref<1x16x1024xf32, #tpu.memory_space<vmem>>) attributes {dimension_semantics = [#tpu.dimension_semantics<parallel>], iteration_bounds = array<i64: 2>, scalar_prefetch = 0 : i64, scratch_operands = 0 : i64, tpu.core_type = #tpu.core_type<tc>, window_params = [{transform_indices = @transform_0, window_bounds = array<i64: 1, 16, 1024>}, {pipeline_mode = #tpu.pipeline_mode<synchronous>, transform_indices = @transform_1, window_bounds = array<i64: 4, 16>}, {pipeline_mode = #tpu.pipeline_mode<synchronous>, transform_indices = @transform_2, window_bounds = array<i64: 4, 2>}, {pipeline_mode = #tpu.pipeline_mode<synchronous>, transform_indices = @transform_3, window_bounds = array<i64: 4, 9>}, {pipeline_mode = #tpu.pipeline_mode<synchronous>, transform_indices = @transform_4, window_bounds = array<i64: 16, 4>}, {pipeline_mode = #tpu.pipeline_mode<synchronous>, transform_indices = @transform_5, window_bounds = array<i64: 16, 1>}, {transform_indices = @transform_6, window_bounds = array<i64: 1, 16, 1024>}]} {
    %c0 = arith.constant 0 : index
    %c0_0 = arith.constant 0 : index
    %c0_1 = arith.constant 0 : index
    %0 = vector.load %arg1[%c0, %c0_0, %c0_1] : memref<1x16x1024xbf16, #tpu.memory_space<vmem>>, vector<1x16x1024xbf16>
    %1 = vector.shape_cast %0 : vector<1x16x1024xbf16> to vector<16x1024xbf16>
    %c0_2 = arith.constant 0 : index
    %c0_3 = arith.constant 0 : index
    %2 = vector.load %arg3[%c0_2, %c0_3] : memref<4x2xf32, #tpu.memory_space<vmem>>, vector<4x2xf32>
    %3 = vector.extract_strided_slice %2 {offsets = [0, 0], sizes = [4, 1], strides = [1, 1]} : vector<4x2xf32> to vector<4x1xf32>
    %4 = vector.extract_strided_slice %2 {offsets = [0, 1], sizes = [4, 1], strides = [1, 1]} : vector<4x2xf32> to vector<4x1xf32>
    %c0_4 = arith.constant 0 : index
    %c0_5 = arith.constant 0 : index
    %5 = vector.load %arg2[%c0_4, %c0_5] : memref<4x16xbf16, #tpu.memory_space<vmem>>, vector<4x16xbf16>
    %cst = arith.constant dense<0.000000e+00> : vector<4x1024xf32>
    %6 = tpu.matmul %5, %1, %cst {dimension_numbers = #tpu.dot_dimension_numbers<[1], [0], [0], [1], [0, 0, 1, 1], [], []>} : vector<4x16xbf16>, vector<16x1024xbf16>, vector<4x1024xf32> -> vector<4x1024xf32>
    %7 = vector.broadcast %3 : vector<4x1xf32> to vector<4x1024xf32>
    %8 = arith.addf %6, %7 : vector<4x1024xf32>
    %cst_6 = arith.constant 0.000000e+00 : f32
    %9 = vector.broadcast %cst_6 : f32 to vector<4x1024xf32>
    %10 = arith.maximumf %8, %9 : vector<4x1024xf32>
    %c0_7 = arith.constant 0 : index
    %c0_8 = arith.constant 0 : index
    %11 = vector.load %arg4[%c0_7, %c0_8] : memref<4x9xf32, #tpu.memory_space<vmem>>, vector<4x9xf32>
    %12 = tpu.iota {dimensions = array<i32: 1>} : vector<1x1024xi32>
    %13 = arith.sitofp %12 : vector<1x1024xi32> to vector<1x1024xf32>
    %cst_9 = arith.constant 5.000000e-01 : f32
    %14 = vector.broadcast %cst_9 : f32 to vector<1x1024xf32>
    %15 = arith.addf %13, %14 : vector<1x1024xf32>
    %cst_10 = arith.constant 2.560000e+02 : f32
    %16 = vector.broadcast %cst_10 : f32 to vector<1x1024xf32>
    %17 = arith.divf %15, %16 : vector<1x1024xf32>
    %18 = math.floor %17 : vector<1x1024xf32>
    %cst_11 = arith.constant 2.560000e+02 : f32
    %19 = vector.broadcast %cst_11 : f32 to vector<1x1024xf32>
    %20 = arith.mulf %18, %19 : vector<1x1024xf32>
    %21 = arith.subf %13, %20 : vector<1x1024xf32>
    %cst_12 = arith.constant 5.000000e-01 : f32
    %22 = vector.broadcast %cst_12 : f32 to vector<1x1024xf32>
    %23 = arith.addf %21, %22 : vector<1x1024xf32>
    %cst_13 = arith.constant 1.600000e+01 : f32
    %24 = vector.broadcast %cst_13 : f32 to vector<1x1024xf32>
    %25 = arith.divf %23, %24 : vector<1x1024xf32>
    %26 = math.floor %25 : vector<1x1024xf32>
    %cst_14 = arith.constant 1.600000e+01 : f32
    %27 = vector.broadcast %cst_14 : f32 to vector<1x1024xf32>
    %28 = arith.mulf %26, %27 : vector<1x1024xf32>
    %29 = arith.subf %21, %28 : vector<1x1024xf32>
    %cst_15 = arith.constant 1.000000e+00 : f32
    %30 = vector.broadcast %cst_15 : f32 to vector<1x1024xf32>
    %31 = arith.cmpf oge, %26, %30 : vector<1x1024xf32>
    %cst_16 = arith.constant 1.400000e+01 : f32
    %32 = vector.broadcast %cst_16 : f32 to vector<1x1024xf32>
    %33 = arith.cmpf ole, %26, %32 : vector<1x1024xf32>
    %cst_17 = arith.constant 1.000000e+00 : f32
    %34 = vector.broadcast %cst_17 : f32 to vector<1x1024xf32>
    %35 = arith.cmpf oge, %29, %34 : vector<1x1024xf32>
    %cst_18 = arith.constant 1.400000e+01 : f32
    %36 = vector.broadcast %cst_18 : f32 to vector<1x1024xf32>
    %37 = arith.cmpf ole, %29, %36 : vector<1x1024xf32>
    %c17_i32 = arith.constant 17 : i32
    %38 = tpu.dynamic_rotate %10 by %c17_i32 dim 1 : vector<4x1024xf32>, i32 -> vector<4x1024xf32>
    %39 = arith.andi %31, %35 : vector<1x1024xi1>
    %40 = arith.extui %39 : vector<1x1024xi1> to vector<1x1024xi32>
    %41 = arith.sitofp %40 : vector<1x1024xi32> to vector<1x1024xf32>
    %42 = vector.broadcast %41 : vector<1x1024xf32> to vector<4x1024xf32>
    %43 = arith.mulf %38, %42 : vector<4x1024xf32>
    %44 = vector.extract_strided_slice %11 {offsets = [0, 0], sizes = [4, 1], strides = [1, 1]} : vector<4x9xf32> to vector<4x1xf32>
    %45 = vector.broadcast %44 : vector<4x1xf32> to vector<4x1024xf32>
    %46 = arith.mulf %43, %45 : vector<4x1024xf32>
    %c16_i32 = arith.constant 16 : i32
    %47 = tpu.dynamic_rotate %10 by %c16_i32 dim 1 : vector<4x1024xf32>, i32 -> vector<4x1024xf32>
    %48 = arith.extui %31 : vector<1x1024xi1> to vector<1x1024xi32>
    %49 = arith.sitofp %48 : vector<1x1024xi32> to vector<1x1024xf32>
    %50 = vector.broadcast %49 : vector<1x1024xf32> to vector<4x1024xf32>
    %51 = arith.mulf %47, %50 : vector<4x1024xf32>
    %52 = vector.extract_strided_slice %11 {offsets = [0, 1], sizes = [4, 1], strides = [1, 1]} : vector<4x9xf32> to vector<4x1xf32>
    %53 = vector.broadcast %52 : vector<4x1xf32> to vector<4x1024xf32>
    %54 = arith.mulf %51, %53 : vector<4x1024xf32>
    %55 = arith.addf %46, %54 : vector<4x1024xf32>
    %c15_i32 = arith.constant 15 : i32
    %56 = tpu.dynamic_rotate %10 by %c15_i32 dim 1 : vector<4x1024xf32>, i32 -> vector<4x1024xf32>
    %57 = arith.andi %31, %37 : vector<1x1024xi1>
    %58 = arith.extui %57 : vector<1x1024xi1> to vector<1x1024xi32>
    %59 = arith.sitofp %58 : vector<1x1024xi32> to vector<1x1024xf32>
    %60 = vector.broadcast %59 : vector<1x1024xf32> to vector<4x1024xf32>
    %61 = arith.mulf %56, %60 : vector<4x1024xf32>
    %62 = vector.extract_strided_slice %11 {offsets = [0, 2], sizes = [4, 1], strides = [1, 1]} : vector<4x9xf32> to vector<4x1xf32>
    %63 = vector.broadcast %62 : vector<4x1xf32> to vector<4x1024xf32>
    %64 = arith.mulf %61, %63 : vector<4x1024xf32>
    %65 = arith.addf %55, %64 : vector<4x1024xf32>
    %c1_i32 = arith.constant 1 : i32
    %66 = tpu.dynamic_rotate %10 by %c1_i32 dim 1 : vector<4x1024xf32>, i32 -> vector<4x1024xf32>
    %67 = arith.extui %35 : vector<1x1024xi1> to vector<1x1024xi32>
    %68 = arith.sitofp %67 : vector<1x1024xi32> to vector<1x1024xf32>
    %69 = vector.broadcast %68 : vector<1x1024xf32> to vector<4x1024xf32>
    %70 = arith.mulf %66, %69 : vector<4x1024xf32>
    %71 = vector.extract_strided_slice %11 {offsets = [0, 3], sizes = [4, 1], strides = [1, 1]} : vector<4x9xf32> to vector<4x1xf32>
    %72 = vector.broadcast %71 : vector<4x1xf32> to vector<4x1024xf32>
    %73 = arith.mulf %70, %72 : vector<4x1024xf32>
    %74 = arith.addf %65, %73 : vector<4x1024xf32>
    %75 = vector.extract_strided_slice %11 {offsets = [0, 4], sizes = [4, 1], strides = [1, 1]} : vector<4x9xf32> to vector<4x1xf32>
    %76 = vector.broadcast %75 : vector<4x1xf32> to vector<4x1024xf32>
    %77 = arith.mulf %10, %76 : vector<4x1024xf32>
    %78 = arith.addf %74, %77 : vector<4x1024xf32>
    %c1023_i32 = arith.constant 1023 : i32
    %79 = tpu.dynamic_rotate %10 by %c1023_i32 dim 1 : vector<4x1024xf32>, i32 -> vector<4x1024xf32>
    %80 = arith.extui %37 : vector<1x1024xi1> to vector<1x1024xi32>
    %81 = arith.sitofp %80 : vector<1x1024xi32> to vector<1x1024xf32>
    %82 = vector.broadcast %81 : vector<1x1024xf32> to vector<4x1024xf32>
    %83 = arith.mulf %79, %82 : vector<4x1024xf32>
    %84 = vector.extract_strided_slice %11 {offsets = [0, 5], sizes = [4, 1], strides = [1, 1]} : vector<4x9xf32> to vector<4x1xf32>
    %85 = vector.broadcast %84 : vector<4x1xf32> to vector<4x1024xf32>
    %86 = arith.mulf %83, %85 : vector<4x1024xf32>
    %87 = arith.addf %78, %86 : vector<4x1024xf32>
    %c1009_i32 = arith.constant 1009 : i32
    %88 = tpu.dynamic_rotate %10 by %c1009_i32 dim 1 : vector<4x1024xf32>, i32 -> vector<4x1024xf32>
    %89 = arith.andi %33, %35 : vector<1x1024xi1>
    %90 = arith.extui %89 : vector<1x1024xi1> to vector<1x1024xi32>
    %91 = arith.sitofp %90 : vector<1x1024xi32> to vector<1x1024xf32>
    %92 = vector.broadcast %91 : vector<1x1024xf32> to vector<4x1024xf32>
    %93 = arith.mulf %88, %92 : vector<4x1024xf32>
    %94 = vector.extract_strided_slice %11 {offsets = [0, 6], sizes = [4, 1], strides = [1, 1]} : vector<4x9xf32> to vector<4x1xf32>
    %95 = vector.broadcast %94 : vector<4x1xf32> to vector<4x1024xf32>
    %96 = arith.mulf %93, %95 : vector<4x1024xf32>
    %97 = arith.addf %87, %96 : vector<4x1024xf32>
    %c1008_i32 = arith.constant 1008 : i32
    %98 = tpu.dynamic_rotate %10 by %c1008_i32 dim 1 : vector<4x1024xf32>, i32 -> vector<4x1024xf32>
    %99 = arith.extui %33 : vector<1x1024xi1> to vector<1x1024xi32>
    %100 = arith.sitofp %99 : vector<1x1024xi32> to vector<1x1024xf32>
    %101 = vector.broadcast %100 : vector<1x1024xf32> to vector<4x1024xf32>
    %102 = arith.mulf %98, %101 : vector<4x1024xf32>
    %103 = vector.extract_strided_slice %11 {offsets = [0, 7], sizes = [4, 1], strides = [1, 1]} : vector<4x9xf32> to vector<4x1xf32>
    %104 = vector.broadcast %103 : vector<4x1xf32> to vector<4x1024xf32>
    %105 = arith.mulf %102, %104 : vector<4x1024xf32>
    %106 = arith.addf %97, %105 : vector<4x1024xf32>
    %c1007_i32 = arith.constant 1007 : i32
    %107 = tpu.dynamic_rotate %10 by %c1007_i32 dim 1 : vector<4x1024xf32>, i32 -> vector<4x1024xf32>
    %108 = arith.andi %33, %37 : vector<1x1024xi1>
    %109 = arith.extui %108 : vector<1x1024xi1> to vector<1x1024xi32>
    %110 = arith.sitofp %109 : vector<1x1024xi32> to vector<1x1024xf32>
    %111 = vector.broadcast %110 : vector<1x1024xf32> to vector<4x1024xf32>
    %112 = arith.mulf %107, %111 : vector<4x1024xf32>
    %113 = vector.extract_strided_slice %11 {offsets = [0, 8], sizes = [4, 1], strides = [1, 1]} : vector<4x9xf32> to vector<4x1xf32>
    %114 = vector.broadcast %113 : vector<4x1xf32> to vector<4x1024xf32>
    %115 = arith.mulf %112, %114 : vector<4x1024xf32>
    %116 = arith.addf %106, %115 : vector<4x1024xf32>
    %117 = vector.broadcast %4 : vector<4x1xf32> to vector<4x1024xf32>
    %118 = arith.addf %116, %117 : vector<4x1024xf32>
    %cst_19 = arith.constant 0.000000e+00 : f32
    %119 = vector.broadcast %cst_19 : f32 to vector<4x1024xf32>
    %120 = arith.maximumf %118, %119 : vector<4x1024xf32>
    %121 = arith.truncf %120 : vector<4x1024xf32> to vector<4x1024xbf16>
    %c0_20 = arith.constant 0 : index
    %c0_21 = arith.constant 0 : index
    %122 = vector.load %arg5[%c0_20, %c0_21] : memref<16x4xbf16, #tpu.memory_space<vmem>>, vector<16x4xbf16>
    %cst_22 = arith.constant dense<0.000000e+00> : vector<16x1024xf32>
    %123 = tpu.matmul %122, %121, %cst_22 {dimension_numbers = #tpu.dot_dimension_numbers<[1], [0], [0], [1], [0, 0, 1, 1], [], []>} : vector<16x4xbf16>, vector<4x1024xbf16>, vector<16x1024xf32> -> vector<16x1024xf32>
    %c0_23 = arith.constant 0 : index
    %c0_24 = arith.constant 0 : index
    %124 = vector.load %arg6[%c0_23, %c0_24] : memref<16x1xf32, #tpu.memory_space<vmem>>, vector<16x1xf32>
    %125 = vector.broadcast %124 : vector<16x1xf32> to vector<16x1024xf32>
    %126 = arith.addf %123, %125 : vector<16x1024xf32>
    %127 = arith.extf %1 : vector<16x1024xbf16> to vector<16x1024xf32>
    %128 = arith.addf %126, %127 : vector<16x1024xf32>
    %cst_25 = arith.constant 0.000000e+00 : f32
    %129 = vector.broadcast %cst_25 : f32 to vector<16x1024xf32>
    %130 = arith.maximumf %128, %129 : vector<16x1024xf32>
    %c0_26 = arith.constant 0 : index
    %c0_27 = arith.constant 0 : index
    %c0_28 = arith.constant 0 : index
    %131 = vector.load %arg7[%c0_26, %c0_27, %c0_28] : memref<1x16x1024xf32, #tpu.memory_space<vmem>>, vector<1x16x1024xf32>
    %132 = vector.shape_cast %131 : vector<1x16x1024xf32> to vector<16x1024xf32>
    %133 = vector.shape_cast %130 : vector<16x1024xf32> to vector<1x16x1024xf32>
    tpu.vector_store %arg7[%c0_26, %c0_27, %c0_28], %133 {strides = array<i32>} : memref<1x16x1024xf32, #tpu.memory_space<vmem>>, vector<1x16x1024xf32>,
    return
  }
  func.func @transform_0(%arg0: i32) -> (i32, i32, i32) {
    %c0_i32 = arith.constant 0 : i32
    %c0_i32_0 = arith.constant 0 : i32
    %c0_i32_1 = arith.constant 0 : i32
    return %arg0, %c0_i32, %c0_i32_0 : i32, i32, i32
  }
  func.func @transform_1(%arg0: i32) -> (i32, i32) {
    %c0_i32 = arith.constant 0 : i32
    %c0_i32_0 = arith.constant 0 : i32
    %c0_i32_1 = arith.constant 0 : i32
    return %c0_i32, %c0_i32_0 : i32, i32
  }
  func.func @transform_2(%arg0: i32) -> (i32, i32) {
    %c0_i32 = arith.constant 0 : i32
    %c0_i32_0 = arith.constant 0 : i32
    %c0_i32_1 = arith.constant 0 : i32
    return %c0_i32, %c0_i32_0 : i32, i32
  }
  func.func @transform_3(%arg0: i32) -> (i32, i32) {
    %c0_i32 = arith.constant 0 : i32
    %c0_i32_0 = arith.constant 0 : i32
    %c0_i32_1 = arith.constant 0 : i32
    return %c0_i32, %c0_i32_0 : i32, i32
  }
  func.func @transform_4(%arg0: i32) -> (i32, i32) {
    %c0_i32 = arith.constant 0 : i32
    %c0_i32_0 = arith.constant 0 : i32
    %c0_i32_1 = arith.constant 0 : i32
    return %c0_i32, %c0_i32_0 : i32, i32
  }
  func.func @transform_5(%arg0: i32) -> (i32, i32) {
    %c0_i32 = arith.constant 0 : i32
    %c0_i32_0 = arith.constant 0 : i32
    %c0_i32_1 = arith.constant 0 : i32
    return %c0_i32, %c0_i32_0 : i32, i32
  }
  func.func @transform_6(%arg0: i32) -> (i32, i32, i32) {
    %c0_i32 = arith.constant 0 : i32
    %c0_i32_0 = arith.constant 0 : i32
    %c0_i32_1 = arith.constant 0 : i32
    return %arg0, %c0_i32, %c0_i32_0 : i32, i32, i32
  }
}

</mosaic_0001>

<llo_original>
// kernel: tpu_custom_call.1
$region0: #{tpu_custom_call.1}
  #allocation0 [shape = 'u32[]', space=smem, size = 0x4, offset = 0x4, fixed_abs, tag = 'smem constant byte address 0x4 - core index']
  #allocation1 [shape = 'u32[144,128]{1,0:T(1,128)}', space=vmem, size = 0x12000, scoped, tag = 'internal scratch']
  %s0 = inlined_call_operand.hbm [shape: bf16[2,16,1024], index: 0, kind: input, shape index: {}]
  %s1 = inlined_call_operand.vmem [shape: bf16[4,16], index: 1, kind: input, shape index: {}]
  %s2 = inlined_call_operand.vmem [shape: f32[4,2], index: 2, kind: input, shape index: {}]
  %s3 = inlined_call_operand.vmem [shape: f32[4,9], index: 3, kind: input, shape index: {}]
  %s4 = inlined_call_operand.vmem [shape: bf16[16,4], index: 4, kind: input, shape index: {}]
  %s5 = inlined_call_operand.vmem [shape: f32[16,1], index: 5, kind: input, shape index: {}]
  %s6 = inlined_call_operand.hbm [shape: f32[2,16,1024], index: 6, kind: output, shape index: {}]
  %s7 = sld [smem:[#allocation0]]
  $region61: #{tpu_custom_call.1} parent=0
    _
  %s9 = ssub.s32 1, %s7
  %s10 = scalar_select 0, %s9, %s7
  $region1: #{tpu_custom_call.1} parent=0
    #allocation2 [shape = 'u8[65536]{0}', space=vmem, size = 0x10000, scoped, tag = 'input window, operand 0']
    #allocation3 [shape = 's32[2]{0}', space=sflag, size = 0x8, scoped, tag = 'scoped memory for tpu_custom_call.1']
    #allocation4 [shape = 's32[2]{0}', space=sflag, size = 0x8, scoped, tag = 'scoped memory for tpu_custom_call.1']
    #allocation5 [shape = 'u8[131072]{0}', space=vmem, size = 0x20000, scoped, tag = 'output window, operand 0']
    %11 = vsyncpa [#allocation3], 0
    %s12 = scalar_lea.sflag [#allocation3], 1
    %13 = vsyncpa %s12, 0
    %14 = vsyncpa [#allocation4], 0
    %s15 = scalar_lea.sflag [#allocation4], 1
    %16 = vsyncpa %s15, 0
    loop: start=0, step=1, limit=4
    $region2: #{tpu_custom_call.1} parent=1 // loop_pre_header
      _
    $region3: #{tpu_custom_call.1} parent=1 // loop_header
      %s18 = sphi 0, %s22
      %p19 = scmp.ge.s32.totalorder %s18, 4
      %s28 = sphi 0, %s30
      %s31 = sphi 0, %s28
      %s32 = sphi 0, %s31
      %s48 = sphi 0, %s32
      %s52 = sphi 0, %s52
      %s54 = sphi 0, %s52
      %s55 = sphi 0, %s54
      %s69 = sphi 0, %s55
      %s73 = sphi 0, %s73
      %s75 = sphi 0, %s73
      %s76 = sphi 0, %s75
      %s90 = sphi 0, %s76
      %s94 = sphi 0, %s94
      %s96 = sphi 0, %s94
      %s97 = sphi 0, %s96
      %s111 = sphi 0, %s97
      %s115 = sphi 0, %s115
      %s117 = sphi 0, %s115
      %s118 = sphi 0, %s117
      %s132 = sphi 0, %s118
      %s136 = sphi 0, %s136
      %s138 = sphi 0, %s136
      %s139 = sphi 0, %s138
      %s153 = sphi 0, %s139
      %s159 = sphi 0, %s161
      %s162 = sphi 0, %s159
      %s163 = sphi 0, %s162
      %s179 = sphi 0, %s163
    $region4: #{tpu_custom_call.1} parent=1 // loop_header_branch
      %21 = sbr.rel (%p19) target = $region8
    $region5: #{tpu_custom_call.1} parent=1 // loop_body
      %s23 = ssub.s32 %s18, 1
      %s24 = ssub.s32 %s18, 2
      %s25 = sadd.s32 %s18, 1
      %s26 = ssub.s32 %s18, %s25
      %p27 = scmp.eq.s32.totalorder %s26, 0
      %s29 = sadd.s32 %s28, 1
      %s30 = scalar_select %p27, %s28, %s29
      %p33 = pneg %p27
      %p34 = scmp.eq.s32.totalorder %s18, 1
      %p35 = por %p33, %p34
      %p36 = scmp.ne.s32.totalorder %s28, %s31
      %p37 = scmp.eq.s32.totalorder %s18, 0
      %p38 = por %p36, %p37
      %p39 = scmp.ne.s32.totalorder %s28, %s31
      %p40 = scmp.eq.s32.totalorder %s23, 1
      %p41 = por %p39, %p40
      %p42 = scmp.ne.s32.totalorder %s31, %s32
      %p43 = scmp.eq.s32.totalorder %s23, 0
      %p44 = por %p42, %p43
      %p45 = scmp.ne.s32.totalorder %s31, %s32
      %p46 = scmp.eq.s32.totalorder %s24, 1
      %p47 = por %p45, %p46
      %p49 = scmp.ne.s32.totalorder %s32, %s48
      %p50 = scmp.eq.s32.totalorder %s24, 0
      %p51 = por %p49, %p50
      %s53 = sadd.s32 %s52, 1
      %p56 = scmp.eq.s32.totalorder %s18, 1
      %p57 = scmp.ne.s32.totalorder %s52, %s54
      %p58 = scmp.eq.s32.totalorder %s18, 0
      %p59 = por %p57, %p58
      %p60 = scmp.ne.s32.totalorder %s52, %s54
      %p61 = scmp.eq.s32.totalorder %s23, 1
      %p62 = por %p60, %p61
      %p63 = scmp.ne.s32.totalorder %s54, %s55
      %p64 = scmp.eq.s32.totalorder %s23, 0
      %p65 = por %p63, %p64
      %p66 = scmp.ne.s32.totalorder %s54, %s55
      %p67 = scmp.eq.s32.totalorder %s24, 1
      %p68 = por %p66, %p67
      %p70 = scmp.ne.s32.totalorder %s55, %s69
      %p71 = scmp.eq.s32.totalorder %s24, 0
      %p72 = por %p70, %p71
      %s74 = sadd.s32 %s73, 1
      %p77 = scmp.eq.s32.totalorder %s18, 1
      %p78 = scmp.ne.s32.totalorder %s73, %s75
      %p79 = scmp.eq.s32.totalorder %s18, 0
      %p80 = por %p78, %p79
      %p81 = scmp.ne.s32.totalorder %s73, %s75
      %p82 = scmp.eq.s32.totalorder %s23, 1
      %p83 = por %p81, %p82
      %p84 = scmp.ne.s32.totalorder %s75, %s76
      %p85 = scmp.eq.s32.totalorder %s23, 0
      %p86 = por %p84, %p85
      %p87 = scmp.ne.s32.totalorder %s75, %s76
      %p88 = scmp.eq.s32.totalorder %s24, 1
      %p89 = por %p87, %p88
      %p91 = scmp.ne.s32.totalorder %s76, %s90
      %p92 = scmp.eq.s32.totalorder %s24, 0
      %p93 = por %p91, %p92
      %s95 = sadd.s32 %s94, 1
      %p98 = scmp.eq.s32.totalorder %s18, 1
      %p99 = scmp.ne.s32.totalorder %s94, %s96
      %p100 = scmp.eq.s32.totalorder %s18, 0
      %p101 = por %p99, %p100
      %p102 = scmp.ne.s32.totalorder %s94, %s96
      %p103 = scmp.eq.s32.totalorder %s23, 1
      %p104 = por %p102, %p103
      %p105 = scmp.ne.s32.totalorder %s96, %s97
      %p106 = scmp.eq.s32.totalorder %s23, 0
      %p107 = por %p105, %p106
      %p108 = scmp.ne.s32.totalorder %s96, %s97
      %p109 = scmp.eq.s32.totalorder %s24, 1
      %p110 = por %p108, %p109
      %p112 = scmp.ne.s32.totalorder %s97, %s111
      %p113 = scmp.eq.s32.totalorder %s24, 0
      %p114 = por %p112, %p113
      %s116 = sadd.s32 %s115, 1
      %p119 = scmp.eq.s32.totalorder %s18, 1
      %p120 = scmp.ne.s32.totalorder %s115, %s117
      %p121 = scmp.eq.s32.totalorder %s18, 0
      %p122 = por %p120, %p121
      %p123 = scmp.ne.s32.totalorder %s115, %s117
      %p124 = scmp.eq.s32.totalorder %s23, 1
      %p125 = por %p123, %p124
      %p126 = scmp.ne.s32.totalorder %s117, %s118
      %p127 = scmp.eq.s32.totalorder %s23, 0
      %p128 = por %p126, %p127
      %p129 = scmp.ne.s32.totalorder %s117, %s118
      %p130 = scmp.eq.s32.totalorder %s24, 1
      %p131 = por %p129, %p130
      %p133 = scmp.ne.s32.totalorder %s118, %s132
      %p134 = scmp.eq.s32.totalorder %s24, 0
      %p135 = por %p133, %p134
      %s137 = sadd.s32 %s136, 1
      %p140 = scmp.eq.s32.totalorder %s18, 1
      %p141 = scmp.ne.s32.totalorder %s136, %s138
      %p142 = scmp.eq.s32.totalorder %s18, 0
      %p143 = por %p141, %p142
      %p144 = scmp.ne.s32.totalorder %s136, %s138
      %p145 = scmp.eq.s32.totalorder %s23, 1
      %p146 = por %p144, %p145
      %p147 = scmp.ne.s32.totalorder %s138, %s139
      %p148 = scmp.eq.s32.totalorder %s23, 0
      %p149 = por %p147, %p148
      %p150 = scmp.ne.s32.totalorder %s138, %s139
      %p151 = scmp.eq.s32.totalorder %s24, 1
      %p152 = por %p150, %p151
      %p154 = scmp.ne.s32.totalorder %s139, %s153
      %p155 = scmp.eq.s32.totalorder %s24, 0
      %p156 = por %p154, %p155
      %s157 = ssub.s32 %s18, %s25
      %p158 = scmp.eq.s32.totalorder %s157, 0
      %s160 = sadd.s32 %s159, 1
      %s161 = scalar_select %p158, %s159, %s160
      %p164 = pneg %p158
      %p165 = scmp.eq.s32.totalorder %s18, 1
      %p166 = por %p164, %p165
      %p167 = scmp.ne.s32.totalorder %s159, %s162
      %p168 = scmp.eq.s32.totalorder %s18, 0
      %p169 = por %p167, %p168
      %p170 = scmp.ne.s32.totalorder %s159, %s162
      %p171 = scmp.eq.s32.totalorder %s23, 1
      %p172 = por %p170, %p171
      %p173 = scmp.ne.s32.totalorder %s162, %s163
      %p174 = scmp.eq.s32.totalorder %s23, 0
      %p175 = por %p173, %p174
      %p176 = scmp.ne.s32.totalorder %s162, %s163
      %p177 = scmp.eq.s32.totalorder %s24, 1
      %p178 = por %p176, %p177
      %p180 = scmp.ne.s32.totalorder %s163, %s179
      %p181 = scmp.eq.s32.totalorder %s24, 0
      %p182 = por %p180, %p181
      %p183 = scmp.le.s32.totalorder 1, %s18
      %p184 = scmp.lt.s32.totalorder %s18, 3
      %p185 = pnand %p183, %p184
      %p186 = pneg %p185
      // Predicated region
      $region9: #{tpu_custom_call.1} parent=5 // pred_check
        _
      $region10: #{tpu_custom_call.1} parent=5 // pred_check_branch
        %188 = sbr.rel (%p185) target = $region12
      $region11: #{tpu_custom_call.1} parent=5 // pred_region
        %s189 = ssub.s32 %s18, 1
        // Predicated region
        $region13: #{tpu_custom_call.1} parent=11 // pred_check
          %p190 = pneg %p65
        $region14: #{tpu_custom_call.1} parent=11 // pred_check_branch
          %192 = sbr.rel (%p190) target = $region16
        $region15: #{tpu_custom_call.1} parent=11 // pred_region
          _
        $region16: #{tpu_custom_call.1} parent=11 // pred_fallthru
          _
        // Predicated region
        $region17: #{tpu_custom_call.1} parent=11 // pred_check
          %p193 = pneg %p86
        $region18: #{tpu_custom_call.1} parent=11 // pred_check_branch
          %195 = sbr.rel (%p193) target = $region20
        $region19: #{tpu_custom_call.1} parent=11 // pred_region
          _
        $region20: #{tpu_custom_call.1} parent=11 // pred_fallthru
          _
        // Predicated region
        $region21: #{tpu_custom_call.1} parent=11 // pred_check
          %p196 = pneg %p107
        $region22: #{tpu_custom_call.1} parent=11 // pred_check_branch
          %198 = sbr.rel (%p196) target = $region24
        $region23: #{tpu_custom_call.1} parent=11 // pred_region
          _
        $region24: #{tpu_custom_call.1} parent=11 // pred_fallthru
          _
        // Predicated region
        $region25: #{tpu_custom_call.1} parent=11 // pred_check
          %p199 = pneg %p128
        $region26: #{tpu_custom_call.1} parent=11 // pred_check_branch
          %201 = sbr.rel (%p199) target = $region28
        $region27: #{tpu_custom_call.1} parent=11 // pred_region
          _
        $region28: #{tpu_custom_call.1} parent=11 // pred_fallthru
          _
        // Predicated region
        $region29: #{tpu_custom_call.1} parent=11 // pred_check
          %p202 = pneg %p149
        $region30: #{tpu_custom_call.1} parent=11 // pred_check_branch
          %204 = sbr.rel (%p202) target = $region32
        $region31: #{tpu_custom_call.1} parent=11 // pred_region
          _
        $region32: #{tpu_custom_call.1} parent=11 // pred_fallthru
          _
      $region12: #{tpu_custom_call.1} parent=5 // pred_fallthru
        _
      %p205 = scmp.lt.s32.totalorder %s18, 2
      // Predicated region
      $region33: #{tpu_custom_call.1} parent=5 // pred_check
        %p206 = pneg %p205
      $region34: #{tpu_custom_call.1} parent=5 // pred_check_branch
        %208 = sbr.rel (%p206) target = $region36
      $region35: #{tpu_custom_call.1} parent=5 // pred_region
        // Predicated region
        $region37: #{tpu_custom_call.1} parent=35 // pred_check
          %p209 = pneg %p38
        $region38: #{tpu_custom_call.1} parent=35 // pred_check_branch
          %211 = sbr.rel (%p209) target = $region40
        $region39: #{tpu_custom_call.1} parent=35 // pred_region
          %s212 = sand.u32 %s28, 1
          %s213 = scalar_lea.sflag [#allocation3], %s212
          %s214 = sand.u32 %s28, 1
          %s215 = smul.addr %s214, 64
          %s216 = scalar_lea.vmem [#allocation2], %s215
          %s218 = ssub.s32 1024, 1024
          %219 = vsyncadd %s213, %s218
          %s220 = smul.addr %s18, 16
          %s221 = smul.addr %s220, 64
          %s222 = scalar_lea.hbm %s0, %s221
          %s223 = sshll.u32 %s216, 4
          %s224 = int_to_ptr.vmem [resolvable:$true] %s223
          %229 = dma.hbm_to_vmem [thread:$0]  %s222, 1024, %s224, %s213, 512, 512, 32
        $region40: #{tpu_custom_call.1} parent=35 // pred_fallthru
          _
      $region36: #{tpu_custom_call.1} parent=5 // pred_fallthru
        _
      %p230 = scmp.le.s32.totalorder 1, %s18
      %p231 = scmp.lt.s32.totalorder %s18, 3
      %p232 = pnand %p230, %p231
      %p233 = pneg %p232
      // Predicated region
      $region41: #{tpu_custom_call.1} parent=5 // pred_check
        _
      $region42: #{tpu_custom_call.1} parent=5 // pred_check_branch
        %235 = sbr.rel (%p232) target = $region44
      $region43: #{tpu_custom_call.1} parent=5 // pred_region
        %s236 = ssub.s32 %s18, 1
        %s237 = sand.u32 %s31, 1
        %s238 = scalar_lea.sflag [#allocation3], %s237
        %s239 = sand.u32 %s31, 1
        %s240 = smul.addr %s239, 64
        %s241 = scalar_lea.vmem [#allocation2], %s240
        // Predicated region
        $region45: #{tpu_custom_call.1} parent=43 // pred_check
          %p242 = pneg %p44
        $region46: #{tpu_custom_call.1} parent=43 // pred_check_branch
          %244 = sbr.rel (%p242) target = $region48
        $region47: #{tpu_custom_call.1} parent=43 // pred_region
          %245 = dma.done %s238, 1024
        $region48: #{tpu_custom_call.1} parent=43 // pred_fallthru
          _
        %s246 = sand.u32 %s31, 1
        %s247 = scalar_lea.sflag [#allocation3], %s246
        %s248 = sand.u32 %s31, 1
        %s249 = smul.addr %s248, 64
        %s250 = scalar_lea.vmem [#allocation2], %s249
        %p251 = pneg %p44
        %p252 = pneg %p41
        %p253 = pneg %p65
        %p254 = pneg %p62
        %p255 = pneg %p86
        %p256 = pneg %p83
        %p257 = pneg %p107
        %p258 = pneg %p104
        %p259 = pneg %p128
        %p260 = pneg %p125
        %p261 = pneg %p149
        %p262 = pneg %p146
        %p263 = pneg %p175
        %p264 = pneg %p172
        %s265 = sand.u32 %s162, 1
        %s266 = scalar_lea.sflag [#allocation4], %s265
        %s267 = sand.u32 %s162, 1
        %s268 = smul.addr %s267, 128
        %s269 = scalar_lea.vmem [#allocation5], %s268
        %v271 = vld [vmem:[%s241] sm:$0xff]
        %v272 = vld [vmem:[%s241 + $0x8] sm:$0xff]
        %v273 = vld [vmem:[%s241 + $0x10] sm:$0xff]
        %v274 = vld [vmem:[%s241 + $0x18] sm:$0xff]
        %v275 = vld [vmem:[%s241 + $0x20] sm:$0xff]
        %v276 = vld [vmem:[%s241 + $0x28] sm:$0xff]
        %v277 = vld [vmem:[%s241 + $0x30] sm:$0xff]
        %v278 = vld [vmem:[%s241 + $0x38] sm:$0xff]
        %v279 = vld [vmem:[%s2] sm:$0xf]
        %v280 = vld [vmem:[%s1] sm:$0x3]
        %282 = vset.pattern.permute.xlu0 0
        %283 = vperm.xlu0 %282, %v279
        %v284 = vpop.permute.xlu0 %283
        %v294 = vunpack.c.l.b16 %v271
        %v295 = vunpack.c.h.b16 %v271
        %v296 = vunpack.c.l.b16 %v272
        %v297 = vunpack.c.h.b16 %v272
        %v298 = vunpack.c.l.b16 %v273
        %v299 = vunpack.c.h.b16 %v273
        %v300 = vunpack.c.l.b16 %v274
        %v301 = vunpack.c.h.b16 %v274
        %v302 = vunpack.c.l.b16 %v275
        %v303 = vunpack.c.h.b16 %v275
        %v304 = vunpack.c.l.b16 %v276
        %v305 = vunpack.c.h.b16 %v276
        %v306 = vunpack.c.l.b16 %v277
        %v307 = vunpack.c.h.b16 %v277
        %v308 = vunpack.c.l.b16 %v278
        %v309 = vunpack.c.h.b16 %v278
        %v310 = vpack.c.b16 %v302, %v294
        %v311 = vpack.c.b16 %v303, %v295
        %v312 = vpack.c.b16 %v304, %v296
        %v313 = vpack.c.b16 %v305, %v297
        %v314 = vpack.c.b16 %v306, %v298
        %v315 = vpack.c.b16 %v307, %v299
        %v316 = vpack.c.b16 %v308, %v300
        %v317 = vpack.c.b16 %v309, %v301
        %vm326 = vcmask 130048
        %v328 = vsel %vm326, %v280, 0
        %330 = vmatprep.subr.bf16.mxu0 %v311
        %331 = vmatpush1.bf16.msra.mxu0 %v310
        %332 = vmatprep.subr.bf16.mxu0 0
        %333 = vmatpush1.bf16.msra.mxu0 0
        %334 = vmatprep.subr.bf16.mxu0 0
        %335 = vmatpush1.bf16.msra.mxu0 0
        %336 = vmatprep.subr.bf16.mxu0 0
        %337 = vmatpush1.bf16.msra.mxu0 0
        %338 = vmatprep.subr.bf16.mxu0 0
        %339 = vmatpush1.bf16.msra.mxu0 0
        %340 = vmatprep.subr.bf16.mxu0 0
        %341 = vmatpush1.bf16.msra.mxu0 0
        %342 = vmatprep.subr.bf16.mxu0 0
        %343 = vmatpush1.bf16.msra.mxu0 0
        %344 = vmatprep.subr.bf16.mxu0 0
        %345 = vmatpush1.bf16.msra.mxu0 0
        %346 = vmatprep.subr.bf16.mxu0 0
        %347 = vmatpush1.bf16.msra.mxu0 0
        %348 = vmatprep.subr.bf16.mxu0 0
        %349 = vmatpush1.bf16.msra.mxu0 0
        %350 = vmatprep.subr.bf16.mxu0 0
        %351 = vmatpush1.bf16.msra.mxu0 0
        %352 = vmatprep.subr.bf16.mxu0 0
        %353 = vmatpush1.bf16.msra.mxu0 0
        %354 = vmatprep.subr.bf16.mxu0 0
        %355 = vmatpush1.bf16.msra.mxu0 0
        %356 = vmatprep.subr.bf16.mxu0 0
        %357 = vmatpush1.bf16.msra.mxu0 0
        %358 = vmatprep.subr.bf16.mxu0 0
        %359 = vmatpush1.bf16.msra.mxu0 0
        %360 = vmatprep.subr.bf16.mxu0 0
        %361 = vmatpush1.bf16.msra.mxu0 0
        %362 = vmatprep.mubr.bf16.mxu0 0
        %363 = vmatmul.mubr.bf16.gmra.mrb[0].mxu0 %v328
        %v364 = vpop.f32.mrb[0].mxu0
        %v365 = vadd.f32 %v284, %v364
        %v366 = vpop.f32.mrb[0].mxu0
        %v367 = vadd.f32 %v284, %v366
        %v368 = vpop.f32.mrb[0].mxu0
        %v369 = vpop.f32.mrb[0].mxu0
        %370 = vdwg.mxu0
        %371 = vmatprep.subr.bf16.mxu0 %v313
        %372 = vmatpush1.bf16.msra.mxu0 %v312
        %373 = vmatprep.subr.bf16.mxu0 0
        %374 = vmatpush1.bf16.msra.mxu0 0
        %375 = vmatprep.subr.bf16.mxu0 0
        %376 = vmatpush1.bf16.msra.mxu0 0
        %377 = vmatprep.subr.bf16.mxu0 0
        %378 = vmatpush1.bf16.msra.mxu0 0
        %379 = vmatprep.subr.bf16.mxu0 0
        %380 = vmatpush1.bf16.msra.mxu0 0
        %381 = vmatprep.subr.bf16.mxu0 0
        %382 = vmatpush1.bf16.msra.mxu0 0
        %383 = vmatprep.subr.bf16.mxu0 0
        %384 = vmatpush1.bf16.msra.mxu0 0
        %385 = vmatprep.subr.bf16.mxu0 0
        %386 = vmatpush1.bf16.msra.mxu0 0
        %387 = vmatprep.subr.bf16.mxu0 0
        %388 = vmatpush1.bf16.msra.mxu0 0
        %389 = vmatprep.subr.bf16.mxu0 0
        %390 = vmatpush1.bf16.msra.mxu0 0
        %391 = vmatprep.subr.bf16.mxu0 0
        %392 = vmatpush1.bf16.msra.mxu0 0
        %393 = vmatprep.subr.bf16.mxu0 0
        %394 = vmatpush1.bf16.msra.mxu0 0
        %395 = vmatprep.subr.bf16.mxu0 0
        %396 = vmatpush1.bf16.msra.mxu0 0
        %397 = vmatprep.subr.bf16.mxu0 0
        %398 = vmatpush1.bf16.msra.mxu0 0
        %399 = vmatprep.subr.bf16.mxu0 0
        %400 = vmatpush1.bf16.msra.mxu0 0
        %401 = vmatprep.subr.bf16.mxu0 0
        %402 = vmatpush1.bf16.msra.mxu0 0
        %403 = vmatprep.mubr.bf16.mxu0 0
        %404 = vmatmul.mubr.bf16.gmra.mrb[0].mxu0 %v328
        %v405 = vpop.f32.mrb[0].mxu0
        %v406 = vadd.f32 %v284, %v405
        %v407 = vpop.f32.mrb[0].mxu0
        %v408 = vadd.f32 %v284, %v407
        %v409 = vpop.f32.mrb[0].mxu0
        %v410 = vpop.f32.mrb[0].mxu0
        %411 = vdwg.mxu0
        %412 = vmatprep.subr.bf16.mxu0 %v315
        %413 = vmatpush1.bf16.msra.mxu0 %v314
        %414 = vmatprep.subr.bf16.mxu0 0
        %415 = vmatpush1.bf16.msra.mxu0 0
        %416 = vmatprep.subr.bf16.mxu0 0
        %417 = vmatpush1.bf16.msra.mxu0 0
        %418 = vmatprep.subr.bf16.mxu0 0
        %419 = vmatpush1.bf16.msra.mxu0 0
        %420 = vmatprep.subr.bf16.mxu0 0
        %421 = vmatpush1.bf16.msra.mxu0 0
        %422 = vmatprep.subr.bf16.mxu0 0
        %423 = vmatpush1.bf16.msra.mxu0 0
        %424 = vmatprep.subr.bf16.mxu0 0
        %425 = vmatpush1.bf16.msra.mxu0 0
        %426 = vmatprep.subr.bf16.mxu0 0
        %427 = vmatpush1.bf16.msra.mxu0 0
        %428 = vmatprep.subr.bf16.mxu0 0
        %429 = vmatpush1.bf16.msra.mxu0 0
        %430 = vmatprep.subr.bf16.mxu0 0
        %431 = vmatpush1.bf16.msra.mxu0 0
        %432 = vmatprep.subr.bf16.mxu0 0
        %433 = vmatpush1.bf16.msra.mxu0 0
        %434 = vmatprep.subr.bf16.mxu0 0
        %435 = vmatpush1.bf16.msra.mxu0 0
        %436 = vmatprep.subr.bf16.mxu0 0
        %437 = vmatpush1.bf16.msra.mxu0 0
        %438 = vmatprep.subr.bf16.mxu0 0
        %439 = vmatpush1.bf16.msra.mxu0 0
        %440 = vmatprep.subr.bf16.mxu0 0
        %441 = vmatpush1.bf16.msra.mxu0 0
        %442 = vmatprep.subr.bf16.mxu0 0
        %443 = vmatpush1.bf16.msra.mxu0 0
        %444 = vmatprep.mubr.bf16.mxu0 0
        %445 = vmatmul.mubr.bf16.gmra.mrb[0].mxu0 %v328
        %v446 = vpop.f32.mrb[0].mxu0
        %v447 = vadd.f32 %v284, %v446
        %v448 = vpop.f32.mrb[0].mxu0
        %v449 = vadd.f32 %v284, %v448
        %v450 = vpop.f32.mrb[0].mxu0
        %v451 = vpop.f32.mrb[0].mxu0
        %452 = vdwg.mxu0
        %453 = vmatprep.subr.bf16.mxu0 %v317
        %454 = vmatpush1.bf16.msra.mxu0 %v316
        %455 = vmatprep.subr.bf16.mxu0 0
        %456 = vmatpush1.bf16.msra.mxu0 0
        %457 = vmatprep.subr.bf16.mxu0 0
        %458 = vmatpush1.bf16.msra.mxu0 0
        %459 = vmatprep.subr.bf16.mxu0 0
        %460 = vmatpush1.bf16.msra.mxu0 0
        %461 = vmatprep.subr.bf16.mxu0 0
        %462 = vmatpush1.bf16.msra.mxu0 0
        %463 = vmatprep.subr.bf16.mxu0 0
        %464 = vmatpush1.bf16.msra.mxu0 0
        %465 = vmatprep.subr.bf16.mxu0 0
        %466 = vmatpush1.bf16.msra.mxu0 0
        %467 = vmatprep.subr.bf16.mxu0 0
        %468 = vmatpush1.bf16.msra.mxu0 0
        %469 = vmatprep.subr.bf16.mxu0 0
        %470 = vmatpush1.bf16.msra.mxu0 0
        %471 = vmatprep.subr.bf16.mxu0 0
        %472 = vmatpush1.bf16.msra.mxu0 0
        %473 = vmatprep.subr.bf16.mxu0 0
        %474 = vmatpush1.bf16.msra.mxu0 0
        %475 = vmatprep.subr.bf16.mxu0 0
        %476 = vmatpush1.bf16.msra.mxu0 0
        %477 = vmatprep.subr.bf16.mxu0 0
        %478 = vmatpush1.bf16.msra.mxu0 0
        %479 = vmatprep.subr.bf16.mxu0 0
        %480 = vmatpush1.bf16.msra.mxu0 0
        %481 = vmatprep.subr.bf16.mxu0 0
        %482 = vmatpush1.bf16.msra.mxu0 0
        %483 = vmatprep.subr.bf16.mxu0 0
        %484 = vmatpush1.bf16.msra.mxu0 0
        %485 = vmatprep.mubr.bf16.mxu0 0
        %486 = vmatmul.mubr.bf16.gmra.mrb[0].mxu0 %v328
        %v487 = vpop.f32.mrb[0].mxu0
        %v488 = vadd.f32 %v284, %v487
        %v489 = vpop.f32.mrb[0].mxu0
        %v490 = vadd.f32 %v284, %v489
        %v491 = vpop.f32.mrb[0].mxu0
        %v492 = vpop.f32.mrb[0].mxu0
        %493 = vdwg.mxu0
        %v494 = vmax.f32 %v365, 0.0
        %v495 = vmax.f32 %v367, 0.0
        %v496 = vmax.f32 %v406, 0.0
        %v497 = vmax.f32 %v408, 0.0
        %v498 = vmax.f32 %v447, 0.0
        %v499 = vmax.f32 %v449, 0.0
        %v500 = vmax.f32 %v488, 0.0
        %v501 = vmax.f32 %v490, 0.0
        %v502 = vld [vmem:[%s3] sm:$0xf]
        %v503 = vlaneseq
        %v504 = vand.u32 %v503, 127
        %v505 = vadd.s32 %v504, 128
        %v506 = vadd.s32 %v504, 256
        %v507 = vadd.s32 %v504, 384
        %v508 = vadd.s32 %v504, 512
        %v509 = vadd.s32 %v504, 640
        %v510 = vadd.s32 %v504, 768
        %v511 = vadd.s32 %v504, 896
        %v512 = vcvt.s32.f32 %v504
        %v513 = vcvt.s32.f32 %v505
        %v514 = vcvt.s32.f32 %v506
        %v515 = vcvt.s32.f32 %v507
        %v516 = vcvt.s32.f32 %v508
        %v517 = vcvt.s32.f32 %v509
        %v518 = vcvt.s32.f32 %v510
        %v519 = vcvt.s32.f32 %v511
        %v520 = vadd.f32 %v512, 0.5
        %v521 = vadd.f32 %v513, 0.5
        %v522 = vadd.f32 %v514, 0.5
        %v523 = vadd.f32 %v515, 0.5
        %v524 = vadd.f32 %v516, 0.5
        %v525 = vadd.f32 %v517, 0.5
        %v526 = vadd.f32 %v518, 0.5
        %v527 = vadd.f32 %v519, 0.5
        %v528 = vrcp.pop 256.0
        %v529 = vmul.f32 %v520, %v528
        %v530 = vmul.f32 %v521, %v528
        %v531 = vmul.f32 %v522, %v528
        %v532 = vmul.f32 %v523, %v528
        %v533 = vmul.f32 %v524, %v528
        %v534 = vmul.f32 %v525, %v528
        %v535 = vmul.f32 %v526, %v528
        %v536 = vmul.f32 %v527, %v528
        %v537 = vfloor.f32 %v529
        %v538 = vfloor.f32 %v530
        %v539 = vfloor.f32 %v531
        %v540 = vfloor.f32 %v532
        %v541 = vfloor.f32 %v533
        %v542 = vfloor.f32 %v534
        %v543 = vfloor.f32 %v535
        %v544 = vfloor.f32 %v536
        %v545 = vmul.f32 %v537, 256.0
        %v546 = vmul.f32 %v538, 256.0
        %v547 = vmul.f32 %v539, 256.0
        %v548 = vmul.f32 %v540, 256.0
        %v549 = vmul.f32 %v541, 256.0
        %v550 = vmul.f32 %v542, 256.0
        %v551 = vmul.f32 %v543, 256.0
        %v552 = vmul.f32 %v544, 256.0
        %v553 = vsub.f32 %v512, %v545
        %v554 = vsub.f32 %v513, %v546
        %v555 = vsub.f32 %v514, %v547
        %v556 = vsub.f32 %v515, %v548
        %v557 = vsub.f32 %v516, %v549
        %v558 = vsub.f32 %v517, %v550
        %v559 = vsub.f32 %v518, %v551
        %v560 = vsub.f32 %v519, %v552
        %v561 = vadd.f32 %v553, 0.5
        %v562 = vadd.f32 %v554, 0.5
        %v563 = vadd.f32 %v555, 0.5
        %v564 = vadd.f32 %v556, 0.5
        %v565 = vadd.f32 %v557, 0.5
        %v566 = vadd.f32 %v558, 0.5
        %v567 = vadd.f32 %v559, 0.5
        %v568 = vadd.f32 %v560, 0.5
        %v569 = vrcp.pop 16.0
        %v570 = vmul.f32 %v561, %v569
        %v571 = vmul.f32 %v562, %v569
        %v572 = vmul.f32 %v563, %v569
        %v573 = vmul.f32 %v564, %v569
        %v574 = vmul.f32 %v565, %v569
        %v575 = vmul.f32 %v566, %v569
        %v576 = vmul.f32 %v567, %v569
        %v577 = vmul.f32 %v568, %v569
        %v578 = vfloor.f32 %v570
        %v579 = vfloor.f32 %v571
        %v580 = vfloor.f32 %v572
        %v581 = vfloor.f32 %v573
        %v582 = vfloor.f32 %v574
        %v583 = vfloor.f32 %v575
        %v584 = vfloor.f32 %v576
        %v585 = vfloor.f32 %v577
        %v586 = vmul.f32 %v578, 16.0
        %v587 = vmul.f32 %v579, 16.0
        %v588 = vmul.f32 %v580, 16.0
        %v589 = vmul.f32 %v581, 16.0
        %v590 = vmul.f32 %v582, 16.0
        %v591 = vmul.f32 %v583, 16.0
        %v592 = vmul.f32 %v584, 16.0
        %v593 = vmul.f32 %v585, 16.0
        %v594 = vsub.f32 %v553, %v586
        %v595 = vsub.f32 %v554, %v587
        %v596 = vsub.f32 %v555, %v588
        %v597 = vsub.f32 %v556, %v589
        %v598 = vsub.f32 %v557, %v590
        %v599 = vsub.f32 %v558, %v591
        %v600 = vsub.f32 %v559, %v592
        %v601 = vsub.f32 %v560, %v593
        %vm602 = vcmp.ge.f32.partialorder %v578, 1.0
        %vm603 = vcmp.ge.f32.partialorder %v579, 1.0
        %vm604 = vcmp.ge.f32.partialorder %v580, 1.0
        %vm605 = vcmp.ge.f32.partialorder %v581, 1.0
        %vm606 = vcmp.ge.f32.partialorder %v582, 1.0
        %vm607 = vcmp.ge.f32.partialorder %v583, 1.0
        %vm608 = vcmp.ge.f32.partialorder %v584, 1.0
        %vm609 = vcmp.ge.f32.partialorder %v585, 1.0
        %vm610 = vcmp.le.f32.partialorder %v578, 14.0
        %vm611 = vcmp.le.f32.partialorder %v579, 14.0
        %vm612 = vcmp.le.f32.partialorder %v580, 14.0
        %vm613 = vcmp.le.f32.partialorder %v581, 14.0
        %vm614 = vcmp.le.f32.partialorder %v582, 14.0
        %vm615 = vcmp.le.f32.partialorder %v583, 14.0
        %vm616 = vcmp.le.f32.partialorder %v584, 14.0
        %vm617 = vcmp.le.f32.partialorder %v585, 14.0
        %vm618 = vcmp.ge.f32.partialorder %v594, 1.0
        %vm619 = vcmp.ge.f32.partialorder %v595, 1.0
        %vm620 = vcmp.ge.f32.partialorder %v596, 1.0
        %vm621 = vcmp.ge.f32.partialorder %v597, 1.0
        %vm622 = vcmp.ge.f32.partialorder %v598, 1.0
        %vm623 = vcmp.ge.f32.partialorder %v599, 1.0
        %vm624 = vcmp.ge.f32.partialorder %v600, 1.0
        %vm625 = vcmp.ge.f32.partialorder %v601, 1.0
        %vm626 = vcmp.le.f32.partialorder %v594, 14.0
        %vm627 = vcmp.le.f32.partialorder %v595, 14.0
        %vm628 = vcmp.le.f32.partialorder %v596, 14.0
        %vm629 = vcmp.le.f32.partialorder %v597, 14.0
        %vm630 = vcmp.le.f32.partialorder %v598, 14.0
        %vm631 = vcmp.le.f32.partialorder %v599, 14.0
        %vm632 = vcmp.le.f32.partialorder %v600, 14.0
        %vm633 = vcmp.le.f32.partialorder %v601, 14.0
        %634 = vrot.lane.b32.xlu0 %v494, 17
        %v635 = vpop.permute.xlu0 %634
        %636 = vrot.lane.b32.xlu0 %v495, 17
        %v637 = vpop.permute.xlu0 %636
        %638 = vrot.lane.b32.xlu0 %v496, 17
        %v639 = vpop.permute.xlu0 %638
        %640 = vrot.lane.b32.xlu0 %v497, 17
        %v641 = vpop.permute.xlu0 %640
        %642 = vrot.lane.b32.xlu0 %v498, 17
        %v643 = vpop.permute.xlu0 %642
        %644 = vrot.lane.b32.xlu0 %v499, 17
        %v645 = vpop.permute.xlu0 %644
        %646 = vrot.lane.b32.xlu0 %v500, 17
        %v647 = vpop.permute.xlu0 %646
        %648 = vrot.lane.b32.xlu0 %v501, 17
        %v649 = vpop.permute.xlu0 %648
        %vm650 = vcmp.lt.s32.totalorder %v504, 17
        %v651 = vsel %vm650, %v647, %v649
        %v652 = vsel %vm650, %v645, %v647
        %v653 = vsel %vm650, %v643, %v645
        %v654 = vsel %vm650, %v641, %v643
        %v655 = vsel %vm650, %v639, %v641
        %v656 = vsel %vm650, %v637, %v639
        %v657 = vsel %vm650, %v635, %v637
        %v658 = vsel %vm650, %v649, %v635
        %vm659 = vmand %vm602, %vm618
        %vm660 = vmand %vm603, %vm619
        %vm661 = vmand %vm604, %vm620
        %vm662 = vmand %vm605, %vm621
        %vm663 = vmand %vm606, %vm622
        %vm664 = vmand %vm607, %vm623
        %vm665 = vmand %vm608, %vm624
        %vm666 = vmand %vm609, %vm625
        %v667 = vsel %vm659, 1, 0
        %v668 = vsel %vm660, 1, 0
        %v669 = vsel %vm661, 1, 0
        %v670 = vsel %vm662, 1, 0
        %v671 = vsel %vm663, 1, 0
        %v672 = vsel %vm664, 1, 0
        %v673 = vsel %vm665, 1, 0
        %v674 = vsel %vm666, 1, 0
        %v675 = vcvt.s32.f32 %v667
        %v676 = vcvt.s32.f32 %v668
        %v677 = vcvt.s32.f32 %v669
        %v678 = vcvt.s32.f32 %v670
        %v679 = vcvt.s32.f32 %v671
        %v680 = vcvt.s32.f32 %v672
        %v681 = vcvt.s32.f32 %v673
        %v682 = vcvt.s32.f32 %v674
        %v683 = vmul.f32 %v658, %v675
        %v684 = vmul.f32 %v657, %v676
        %v685 = vmul.f32 %v656, %v677
        %v686 = vmul.f32 %v655, %v678
        %v687 = vmul.f32 %v654, %v679
        %v688 = vmul.f32 %v653, %v680
        %v689 = vmul.f32 %v652, %v681
        %v690 = vmul.f32 %v651, %v682
        %692 = vset.pattern.permute.xlu0 0
        %693 = vperm.xlu0 %692, %v502
        %v694 = vpop.permute.xlu0 %693
        %v696 = vmul.f32 %v683, %v694
        %v697 = vmul.f32 %v684, %v694
        %v698 = vmul.f32 %v685, %v694
        %v699 = vmul.f32 %v686, %v694
        %v700 = vmul.f32 %v687, %v694
        %v701 = vmul.f32 %v688, %v694
        %v702 = vmul.f32 %v689, %v694
        %v703 = vmul.f32 %v690, %v694
        %704 = vrot.lane.b32.xlu0 %v494, 16
        %v705 = vpop.permute.xlu0 %704
        %706 = vrot.lane.b32.xlu0 %v495, 16
        %v707 = vpop.permute.xlu0 %706
        %708 = vrot.lane.b32.xlu0 %v496, 16
        %v709 = vpop.permute.xlu0 %708
        %710 = vrot.lane.b32.xlu0 %v497, 16
        %v711 = vpop.permute.xlu0 %710
        %712 = vrot.lane.b32.xlu0 %v498, 16
        %v713 = vpop.permute.xlu0 %712
        %714 = vrot.lane.b32.xlu0 %v499, 16
        %v715 = vpop.permute.xlu0 %714
        %716 = vrot.lane.b32.xlu0 %v500, 16
        %v717 = vpop.permute.xlu0 %716
        %718 = vrot.lane.b32.xlu0 %v501, 16
        %v719 = vpop.permute.xlu0 %718
        %vm720 = vcmp.lt.s32.totalorder %v504, 16
        %v721 = vsel %vm720, %v717, %v719
        %v722 = vsel %vm720, %v715, %v717
        %v723 = vsel %vm720, %v713, %v715
        %v724 = vsel %vm720, %v711, %v713
        %v725 = vsel %vm720, %v709, %v711
        %v726 = vsel %vm720, %v707, %v709
        %v727 = vsel %vm720, %v705, %v707
        %v728 = vsel %vm720, %v719, %v705
        %v729 = vsel %vm602, 1, 0
        %v730 = vsel %vm603, 1, 0
        %v731 = vsel %vm604, 1, 0
        %v732 = vsel %vm605, 1, 0
        %v733 = vsel %vm606, 1, 0
        %v734 = vsel %vm607, 1, 0
        %v735 = vsel %vm608, 1, 0
        %v736 = vsel %vm609, 1, 0
        %v737 = vcvt.s32.f32 %v729
        %v738 = vcvt.s32.f32 %v730
        %v739 = vcvt.s32.f32 %v731
        %v740 = vcvt.s32.f32 %v732
        %v741 = vcvt.s32.f32 %v733
        %v742 = vcvt.s32.f32 %v734
        %v743 = vcvt.s32.f32 %v735
        %v744 = vcvt.s32.f32 %v736
        %v745 = vmul.f32 %v728, %v737
        %v746 = vmul.f32 %v727, %v738
        %v747 = vmul.f32 %v726, %v739
        %v748 = vmul.f32 %v725, %v740
        %v749 = vmul.f32 %v724, %v741
        %v750 = vmul.f32 %v723, %v742
        %v751 = vmul.f32 %v722, %v743
        %v752 = vmul.f32 %v721, %v744
        %753 = vset.pattern.permute.xlu0 1
        %754 = vperm.xlu0 %753, %v502
        %v755 = vpop.permute.xlu0 %754
        %v757 = vmul.f32 %v745, %v755
        %v758 = vmul.f32 %v746, %v755
        %v759 = vmul.f32 %v747, %v755
        %v760 = vmul.f32 %v748, %v755
        %v761 = vmul.f32 %v749, %v755
        %v762 = vmul.f32 %v750, %v755
        %v763 = vmul.f32 %v751, %v755
        %v764 = vmul.f32 %v752, %v755
        %v765 = vadd.f32 %v696, %v757
        %v766 = vadd.f32 %v697, %v758
        %v767 = vadd.f32 %v698, %v759
        %v768 = vadd.f32 %v699, %v760
        %v769 = vadd.f32 %v700, %v761
        %v770 = vadd.f32 %v701, %v762
        %v771 = vadd.f32 %v702, %v763
        %v772 = vadd.f32 %v703, %v764
        %773 = vrot.lane.b32.xlu0 %v494, 15
        %v774 = vpop.permute.xlu0 %773
        %775 = vrot.lane.b32.xlu0 %v495, 15
        %v776 = vpop.permute.xlu0 %775
        %777 = vrot.lane.b32.xlu0 %v496, 15
        %v778 = vpop.permute.xlu0 %777
        %779 = vrot.lane.b32.xlu0 %v497, 15
        %v780 = vpop.permute.xlu0 %779
        %781 = vrot.lane.b32.xlu0 %v498, 15
        %v782 = vpop.permute.xlu0 %781
        %783 = vrot.lane.b32.xlu0 %v499, 15
        %v784 = vpop.permute.xlu0 %783
        %785 = vrot.lane.b32.xlu0 %v500, 15
        %v786 = vpop.permute.xlu0 %785
        %787 = vrot.lane.b32.xlu0 %v501, 15
        %v788 = vpop.permute.xlu0 %787
        %vm789 = vcmp.lt.s32.totalorder %v504, 15
        %v790 = vsel %vm789, %v786, %v788
        %v791 = vsel %vm789, %v784, %v786
        %v792 = vsel %vm789, %v782, %v784
        %v793 = vsel %vm789, %v780, %v782
        %v794 = vsel %vm789, %v778, %v780
        %v795 = vsel %vm789, %v776, %v778
        %v796 = vsel %vm789, %v774, %v776
        %v797 = vsel %vm789, %v788, %v774
        %vm798 = vmand %vm602, %vm626
        %vm799 = vmand %vm603, %vm627
        %vm800 = vmand %vm604, %vm628
        %vm801 = vmand %vm605, %vm629
        %vm802 = vmand %vm606, %vm630
        %vm803 = vmand %vm607, %vm631
        %vm804 = vmand %vm608, %vm632
        %vm805 = vmand %vm609, %vm633
        %v806 = vsel %vm798, 1, 0
        %v807 = vsel %vm799, 1, 0
        %v808 = vsel %vm800, 1, 0
        %v809 = vsel %vm801, 1, 0
        %v810 = vsel %vm802, 1, 0
        %v811 = vsel %vm803, 1, 0
        %v812 = vsel %vm804, 1, 0
        %v813 = vsel %vm805, 1, 0
        %v814 = vcvt.s32.f32 %v806
        %v815 = vcvt.s32.f32 %v807
        %v816 = vcvt.s32.f32 %v808
        %v817 = vcvt.s32.f32 %v809
        %v818 = vcvt.s32.f32 %v810
        %v819 = vcvt.s32.f32 %v811
        %v820 = vcvt.s32.f32 %v812
        %v821 = vcvt.s32.f32 %v813
        %v822 = vmul.f32 %v797, %v814
        %v823 = vmul.f32 %v796, %v815
        %v824 = vmul.f32 %v795, %v816
        %v825 = vmul.f32 %v794, %v817
        %v826 = vmul.f32 %v793, %v818
        %v827 = vmul.f32 %v792, %v819
        %v828 = vmul.f32 %v791, %v820
        %v829 = vmul.f32 %v790, %v821
        %830 = vset.pattern.permute.xlu0 2
        %831 = vperm.xlu0 %830, %v502
        %v832 = vpop.permute.xlu0 %831
        %v834 = vmul.f32 %v822, %v832
        %v835 = vmul.f32 %v823, %v832
        %v836 = vmul.f32 %v824, %v832
        %v837 = vmul.f32 %v825, %v832
        %v838 = vmul.f32 %v826, %v832
        %v839 = vmul.f32 %v827, %v832
        %v840 = vmul.f32 %v828, %v832
        %v841 = vmul.f32 %v829, %v832
        %v842 = vadd.f32 %v765, %v834
        %v843 = vadd.f32 %v766, %v835
        %v844 = vadd.f32 %v767, %v836
        %v845 = vadd.f32 %v768, %v837
        %v846 = vadd.f32 %v769, %v838
        %v847 = vadd.f32 %v770, %v839
        %v848 = vadd.f32 %v771, %v840
        %v849 = vadd.f32 %v772, %v841
        %850 = vrot.lane.b32.xlu0 %v494, 1
        %v851 = vpop.permute.xlu0 %850
        %852 = vrot.lane.b32.xlu0 %v495, 1
        %v853 = vpop.permute.xlu0 %852
        %854 = vrot.lane.b32.xlu0 %v496, 1
        %v855 = vpop.permute.xlu0 %854
        %856 = vrot.lane.b32.xlu0 %v497, 1
        %v857 = vpop.permute.xlu0 %856
        %858 = vrot.lane.b32.xlu0 %v498, 1
        %v859 = vpop.permute.xlu0 %858
        %860 = vrot.lane.b32.xlu0 %v499, 1
        %v861 = vpop.permute.xlu0 %860
        %862 = vrot.lane.b32.xlu0 %v500, 1
        %v863 = vpop.permute.xlu0 %862
        %864 = vrot.lane.b32.xlu0 %v501, 1
        %v865 = vpop.permute.xlu0 %864
        %vm866 = vcmp.lt.s32.totalorder %v504, 1
        %v867 = vsel %vm866, %v863, %v865
        %v868 = vsel %vm866, %v861, %v863
        %v869 = vsel %vm866, %v859, %v861
        %v870 = vsel %vm866, %v857, %v859
        %v871 = vsel %vm866, %v855, %v857
        %v872 = vsel %vm866, %v853, %v855
        %v873 = vsel %vm866, %v851, %v853
        %v874 = vsel %vm866, %v865, %v851
        %v875 = vsel %vm618, 1, 0
        %v876 = vsel %vm619, 1, 0
        %v877 = vsel %vm620, 1, 0
        %v878 = vsel %vm621, 1, 0
        %v879 = vsel %vm622, 1, 0
        %v880 = vsel %vm623, 1, 0
        %v881 = vsel %vm624, 1, 0
        %v882 = vsel %vm625, 1, 0
        %v883 = vcvt.s32.f32 %v875
        %v884 = vcvt.s32.f32 %v876
        %v885 = vcvt.s32.f32 %v877
        %v886 = vcvt.s32.f32 %v878
        %v887 = vcvt.s32.f32 %v879
        %v888 = vcvt.s32.f32 %v880
        %v889 = vcvt.s32.f32 %v881
        %v890 = vcvt.s32.f32 %v882
        %v891 = vmul.f32 %v874, %v883
        %v892 = vmul.f32 %v873, %v884
        %v893 = vmul.f32 %v872, %v885
        %v894 = vmul.f32 %v871, %v886
        %v895 = vmul.f32 %v870, %v887
        %v896 = vmul.f32 %v869, %v888
        %v897 = vmul.f32 %v868, %v889
        %v898 = vmul.f32 %v867, %v890
        %899 = vset.pattern.permute.xlu0 3
        %900 = vperm.xlu0 %899, %v502
        %v901 = vpop.permute.xlu0 %900
        %v903 = vmul.f32 %v891, %v901
        %v904 = vmul.f32 %v892, %v901
        %v905 = vmul.f32 %v893, %v901
        %v906 = vmul.f32 %v894, %v901
        %v907 = vmul.f32 %v895, %v901
        %v908 = vmul.f32 %v896, %v901
        %v909 = vmul.f32 %v897, %v901
        %v910 = vmul.f32 %v898, %v901
        %v911 = vadd.f32 %v842, %v903
        %v912 = vadd.f32 %v843, %v904
        %v913 = vadd.f32 %v844, %v905
        %v914 = vadd.f32 %v845, %v906
        %v915 = vadd.f32 %v846, %v907
        %v916 = vadd.f32 %v847, %v908
        %v917 = vadd.f32 %v848, %v909
        %v918 = vadd.f32 %v849, %v910
        %919 = vset.pattern.permute.xlu0 4
        %920 = vperm.xlu0 %919, %v502
        %v921 = vpop.permute.xlu0 %920
        %v923 = vmul.f32 %v494, %v921
        %v924 = vmul.f32 %v495, %v921
        %v925 = vmul.f32 %v496, %v921
        %v926 = vmul.f32 %v497, %v921
        %v927 = vmul.f32 %v498, %v921
        %v928 = vmul.f32 %v499, %v921
        %v929 = vmul.f32 %v500, %v921
        %v930 = vmul.f32 %v501, %v921
        %v931 = vadd.f32 %v911, %v923
        %v932 = vadd.f32 %v912, %v924
        %v933 = vadd.f32 %v913, %v925
        %v934 = vadd.f32 %v914, %v926
        %v935 = vadd.f32 %v915, %v927
        %v936 = vadd.f32 %v916, %v928
        %v937 = vadd.f32 %v917, %v929
        %v938 = vadd.f32 %v918, %v930
        %939 = vrot.lane.b32.xlu0 %v494, 127
        %v940 = vpop.permute.xlu0 %939
        %941 = vrot.lane.b32.xlu0 %v495, 127
        %v942 = vpop.permute.xlu0 %941
        %943 = vrot.lane.b32.xlu0 %v496, 127
        %v944 = vpop.permute.xlu0 %943
        %945 = vrot.lane.b32.xlu0 %v497, 127
        %v946 = vpop.permute.xlu0 %945
        %947 = vrot.lane.b32.xlu0 %v498, 127
        %v948 = vpop.permute.xlu0 %947
        %949 = vrot.lane.b32.xlu0 %v499, 127
        %v950 = vpop.permute.xlu0 %949
        %951 = vrot.lane.b32.xlu0 %v500, 127
        %v952 = vpop.permute.xlu0 %951
        %953 = vrot.lane.b32.xlu0 %v501, 127
        %v954 = vpop.permute.xlu0 %953
        %vm955 = vcmp.lt.s32.totalorder %v504, 127
        %v956 = vsel %vm955, %v952, %v954
        %v957 = vsel %vm955, %v950, %v952
        %v958 = vsel %vm955, %v948, %v950
        %v959 = vsel %vm955, %v946, %v948
        %v960 = vsel %vm955, %v944, %v946
        %v961 = vsel %vm955, %v942, %v944
        %v962 = vsel %vm955, %v940, %v942
        %v963 = vsel %vm955, %v954, %v940
        %v964 = vsel %vm626, 1, 0
        %v965 = vsel %vm627, 1, 0
        %v966 = vsel %vm628, 1, 0
        %v967 = vsel %vm629, 1, 0
        %v968 = vsel %vm630, 1, 0
        %v969 = vsel %vm631, 1, 0
        %v970 = vsel %vm632, 1, 0
        %v971 = vsel %vm633, 1, 0
        %v972 = vcvt.s32.f32 %v964
        %v973 = vcvt.s32.f32 %v965
        %v974 = vcvt.s32.f32 %v966
        %v975 = vcvt.s32.f32 %v967
        %v976 = vcvt.s32.f32 %v968
        %v977 = vcvt.s32.f32 %v969
        %v978 = vcvt.s32.f32 %v970
        %v979 = vcvt.s32.f32 %v971
        %v980 = vmul.f32 %v962, %v972
        %v981 = vmul.f32 %v961, %v973
        %v982 = vmul.f32 %v960, %v974
        %v983 = vmul.f32 %v959, %v975
        %v984 = vmul.f32 %v958, %v976
        %v985 = vmul.f32 %v957, %v977
        %v986 = vmul.f32 %v956, %v978
        %v987 = vmul.f32 %v963, %v979
        %988 = vset.pattern.permute.xlu0 5
        %989 = vperm.xlu0 %988, %v502
        %v990 = vpop.permute.xlu0 %989
        %v992 = vmul.f32 %v980, %v990
        %v993 = vmul.f32 %v981, %v990
        %v994 = vmul.f32 %v982, %v990
        %v995 = vmul.f32 %v983, %v990
        %v996 = vmul.f32 %v984, %v990
        %v997 = vmul.f32 %v985, %v990
        %v998 = vmul.f32 %v986, %v990
        %v999 = vmul.f32 %v987, %v990
        %v1000 = vadd.f32 %v931, %v992
        %v1001 = vadd.f32 %v932, %v993
        %v1002 = vadd.f32 %v933, %v994
        %v1003 = vadd.f32 %v934, %v995
        %v1004 = vadd.f32 %v935, %v996
        %v1005 = vadd.f32 %v936, %v997
        %v1006 = vadd.f32 %v937, %v998
        %v1007 = vadd.f32 %v938, %v999
        %1008 = vrot.lane.b32.xlu0 %v494, 113
        %v1009 = vpop.permute.xlu0 %1008
        %1010 = vrot.lane.b32.xlu0 %v495, 113
        %v1011 = vpop.permute.xlu0 %1010
        %1012 = vrot.lane.b32.xlu0 %v496, 113
        %v1013 = vpop.permute.xlu0 %1012
        %1014 = vrot.lane.b32.xlu0 %v497, 113
        %v1015 = vpop.permute.xlu0 %1014
        %1016 = vrot.lane.b32.xlu0 %v498, 113
        %v1017 = vpop.permute.xlu0 %1016
        %1018 = vrot.lane.b32.xlu0 %v499, 113
        %v1019 = vpop.permute.xlu0 %1018
        %1020 = vrot.lane.b32.xlu0 %v500, 113
        %v1021 = vpop.permute.xlu0 %1020
        %1022 = vrot.lane.b32.xlu0 %v501, 113
        %v1023 = vpop.permute.xlu0 %1022
        %vm1024 = vcmp.lt.s32.totalorder %v504, 113
        %v1025 = vsel %vm1024, %v1021, %v1023
        %v1026 = vsel %vm1024, %v1019, %v1021
        %v1027 = vsel %vm1024, %v1017, %v1019
        %v1028 = vsel %vm1024, %v1015, %v1017
        %v1029 = vsel %vm1024, %v1013, %v1015
        %v1030 = vsel %vm1024, %v1011, %v1013
        %v1031 = vsel %vm1024, %v1009, %v1011
        %v1032 = vsel %vm1024, %v1023, %v1009
        %vm1033 = vmand %vm610, %vm618
        %vm1034 = vmand %vm611, %vm619
        %vm1035 = vmand %vm612, %vm620
        %vm1036 = vmand %vm613, %vm621
        %vm1037 = vmand %vm614, %vm622
        %vm1038 = vmand %vm615, %vm623
        %vm1039 = vmand %vm616, %vm624
        %vm1040 = vmand %vm617, %vm625
        %v1041 = vsel %vm1033, 1, 0
        %v1042 = vsel %vm1034, 1, 0
        %v1043 = vsel %vm1035, 1, 0
        %v1044 = vsel %vm1036, 1, 0
        %v1045 = vsel %vm1037, 1, 0
        %v1046 = vsel %vm1038, 1, 0
        %v1047 = vsel %vm1039, 1, 0
        %v1048 = vsel %vm1040, 1, 0
        %v1049 = vcvt.s32.f32 %v1041
        %v1050 = vcvt.s32.f32 %v1042
        %v1051 = vcvt.s32.f32 %v1043
        %v1052 = vcvt.s32.f32 %v1044
        %v1053 = vcvt.s32.f32 %v1045
        %v1054 = vcvt.s32.f32 %v1046
        %v1055 = vcvt.s32.f32 %v1047
        %v1056 = vcvt.s32.f32 %v1048
        %v1057 = vmul.f32 %v1031, %v1049
        %v1058 = vmul.f32 %v1030, %v1050
        %v1059 = vmul.f32 %v1029, %v1051
        %v1060 = vmul.f32 %v1028, %v1052
        %v1061 = vmul.f32 %v1027, %v1053
        %v1062 = vmul.f32 %v1026, %v1054
        %v1063 = vmul.f32 %v1025, %v1055
        %v1064 = vmul.f32 %v1032, %v1056
        %1065 = vset.pattern.permute.xlu0 6
        %1066 = vperm.xlu0 %1065, %v502
        %v1067 = vpop.permute.xlu0 %1066
        %v1069 = vmul.f32 %v1057, %v1067
        %v1070 = vmul.f32 %v1058, %v1067
        %v1071 = vmul.f32 %v1059, %v1067
        %v1072 = vmul.f32 %v1060, %v1067
        %v1073 = vmul.f32 %v1061, %v1067
        %v1074 = vmul.f32 %v1062, %v1067
        %v1075 = vmul.f32 %v1063, %v1067
        %v1076 = vmul.f32 %v1064, %v1067
        %v1077 = vadd.f32 %v1000, %v1069
        %v1078 = vadd.f32 %v1001, %v1070
        %v1079 = vadd.f32 %v1002, %v1071
        %v1080 = vadd.f32 %v1003, %v1072
        %v1081 = vadd.f32 %v1004, %v1073
        %v1082 = vadd.f32 %v1005, %v1074
        %v1083 = vadd.f32 %v1006, %v1075
        %v1084 = vadd.f32 %v1007, %v1076
        %1085 = vrot.lane.b32.xlu0 %v494, 112
        %v1086 = vpop.permute.xlu0 %1085
        %1087 = vrot.lane.b32.xlu0 %v495, 112
        %v1088 = vpop.permute.xlu0 %1087
        %1089 = vrot.lane.b32.xlu0 %v496, 112
        %v1090 = vpop.permute.xlu0 %1089
        %1091 = vrot.lane.b32.xlu0 %v497, 112
        %v1092 = vpop.permute.xlu0 %1091
        %1093 = vrot.lane.b32.xlu0 %v498, 112
        %v1094 = vpop.permute.xlu0 %1093
        %1095 = vrot.lane.b32.xlu0 %v499, 112
        %v1096 = vpop.permute.xlu0 %1095
        %1097 = vrot.lane.b32.xlu0 %v500, 112
        %v1098 = vpop.permute.xlu0 %1097
        %1099 = vrot.lane.b32.xlu0 %v501, 112
        %v1100 = vpop.permute.xlu0 %1099
        %vm1101 = vcmp.lt.s32.totalorder %v504, 112
        %v1102 = vsel %vm1101, %v1098, %v1100
        %v1103 = vsel %vm1101, %v1096, %v1098
        %v1104 = vsel %vm1101, %v1094, %v1096
        %v1105 = vsel %vm1101, %v1092, %v1094
        %v1106 = vsel %vm1101, %v1090, %v1092
        %v1107 = vsel %vm1101, %v1088, %v1090
        %v1108 = vsel %vm1101, %v1086, %v1088
        %v1109 = vsel %vm1101, %v1100, %v1086
        %v1110 = vsel %vm610, 1, 0
        %v1111 = vsel %vm611, 1, 0
        %v1112 = vsel %vm612, 1, 0
        %v1113 = vsel %vm613, 1, 0
        %v1114 = vsel %vm614, 1, 0
        %v1115 = vsel %vm615, 1, 0
        %v1116 = vsel %vm616, 1, 0
        %v1117 = vsel %vm617, 1, 0
        %v1118 = vcvt.s32.f32 %v1110
        %v1119 = vcvt.s32.f32 %v1111
        %v1120 = vcvt.s32.f32 %v1112
        %v1121 = vcvt.s32.f32 %v1113
        %v1122 = vcvt.s32.f32 %v1114
        %v1123 = vcvt.s32.f32 %v1115
        %v1124 = vcvt.s32.f32 %v1116
        %v1125 = vcvt.s32.f32 %v1117
        %v1126 = vmul.f32 %v1108, %v1118
        %v1127 = vmul.f32 %v1107, %v1119
        %v1128 = vmul.f32 %v1106, %v1120
        %v1129 = vmul.f32 %v1105, %v1121
        %v1130 = vmul.f32 %v1104, %v1122
        %v1131 = vmul.f32 %v1103, %v1123
        %v1132 = vmul.f32 %v1102, %v1124
        %v1133 = vmul.f32 %v1109, %v1125
        %1134 = vset.pattern.permute.xlu0 7
        %1135 = vperm.xlu0 %1134, %v502
        %v1136 = vpop.permute.xlu0 %1135
        %v1138 = vmul.f32 %v1126, %v1136
        %v1139 = vmul.f32 %v1127, %v1136
        %v1140 = vmul.f32 %v1128, %v1136
        %v1141 = vmul.f32 %v1129, %v1136
        %v1142 = vmul.f32 %v1130, %v1136
        %v1143 = vmul.f32 %v1131, %v1136
        %v1144 = vmul.f32 %v1132, %v1136
        %v1145 = vmul.f32 %v1133, %v1136
        %v1146 = vadd.f32 %v1077, %v1138
        %v1147 = vadd.f32 %v1078, %v1139
        %v1148 = vadd.f32 %v1079, %v1140
        %v1149 = vadd.f32 %v1080, %v1141
        %v1150 = vadd.f32 %v1081, %v1142
        %v1151 = vadd.f32 %v1082, %v1143
        %v1152 = vadd.f32 %v1083, %v1144
        %v1153 = vadd.f32 %v1084, %v1145
        %1154 = vrot.lane.b32.xlu0 %v494, 111
        %v1155 = vpop.permute.xlu0 %1154
        %1156 = vrot.lane.b32.xlu0 %v495, 111
        %v1157 = vpop.permute.xlu0 %1156
        %1158 = vrot.lane.b32.xlu0 %v496, 111
        %v1159 = vpop.permute.xlu0 %1158
        %1160 = vrot.lane.b32.xlu0 %v497, 111
        %v1161 = vpop.permute.xlu0 %1160
        %1162 = vrot.lane.b32.xlu0 %v498, 111
        %v1163 = vpop.permute.xlu0 %1162
        %1164 = vrot.lane.b32.xlu0 %v499, 111
        %v1165 = vpop.permute.xlu0 %1164
        %1166 = vrot.lane.b32.xlu0 %v500, 111
        %v1167 = vpop.permute.xlu0 %1166
        %1168 = vrot.lane.b32.xlu0 %v501, 111
        %v1169 = vpop.permute.xlu0 %1168
        %vm1170 = vcmp.lt.s32.totalorder %v504, 111
        %v1171 = vsel %vm1170, %v1167, %v1169
        %v1172 = vsel %vm1170, %v1165, %v1167
        %v1173 = vsel %vm1170, %v1163, %v1165
        %v1174 = vsel %vm1170, %v1161, %v1163
        %v1175 = vsel %vm1170, %v1159, %v1161
        %v1176 = vsel %vm1170, %v1157, %v1159
        %v1177 = vsel %vm1170, %v1155, %v1157
        %v1178 = vsel %vm1170, %v1169, %v1155
        %vm1179 = vmand %vm610, %vm626
        %vm1180 = vmand %vm611, %vm627
        %vm1181 = vmand %vm612, %vm628
        %vm1182 = vmand %vm613, %vm629
        %vm1183 = vmand %vm614, %vm630
        %vm1184 = vmand %vm615, %vm631
        %vm1185 = vmand %vm616, %vm632
        %vm1186 = vmand %vm617, %vm633
        %v1187 = vsel %vm1179, 1, 0
        %v1188 = vsel %vm1180, 1, 0
        %v1189 = vsel %vm1181, 1, 0
        %v1190 = vsel %vm1182, 1, 0
        %v1191 = vsel %vm1183, 1, 0
        %v1192 = vsel %vm1184, 1, 0
        %v1193 = vsel %vm1185, 1, 0
        %v1194 = vsel %vm1186, 1, 0
        %v1195 = vcvt.s32.f32 %v1187
        %v1196 = vcvt.s32.f32 %v1188
        %v1197 = vcvt.s32.f32 %v1189
        %v1198 = vcvt.s32.f32 %v1190
        %v1199 = vcvt.s32.f32 %v1191
        %v1200 = vcvt.s32.f32 %v1192
        %v1201 = vcvt.s32.f32 %v1193
        %v1202 = vcvt.s32.f32 %v1194
        %v1203 = vmul.f32 %v1177, %v1195
        %v1204 = vmul.f32 %v1176, %v1196
        %v1205 = vmul.f32 %v1175, %v1197
        %v1206 = vmul.f32 %v1174, %v1198
        %v1207 = vmul.f32 %v1173, %v1199
        %v1208 = vmul.f32 %v1172, %v1200
        %v1209 = vmul.f32 %v1171, %v1201
        %v1210 = vmul.f32 %v1178, %v1202
        %1211 = vset.pattern.permute.xlu0 8
        %1212 = vperm.xlu0 %1211, %v502
        %v1213 = vpop.permute.xlu0 %1212
        %v1215 = vmul.f32 %v1203, %v1213
        %v1216 = vmul.f32 %v1204, %v1213
        %v1217 = vmul.f32 %v1205, %v1213
        %v1218 = vmul.f32 %v1206, %v1213
        %v1219 = vmul.f32 %v1207, %v1213
        %v1220 = vmul.f32 %v1208, %v1213
        %v1221 = vmul.f32 %v1209, %v1213
        %v1222 = vmul.f32 %v1210, %v1213
        %v1223 = vadd.f32 %v1146, %v1215
        %v1224 = vadd.f32 %v1147, %v1216
        %v1225 = vadd.f32 %v1148, %v1217
        %v1226 = vadd.f32 %v1149, %v1218
        %v1227 = vadd.f32 %v1150, %v1219
        %v1228 = vadd.f32 %v1151, %v1220
        %v1229 = vadd.f32 %v1152, %v1221
        %v1230 = vadd.f32 %v1153, %v1222
        %1231 = vset.pattern.permute.xlu0 1
        %1232 = vperm.xlu0 %1231, %v279
        %v1233 = vpop.permute.xlu0 %1232
        %v1235 = vadd.f32 %v1223, %v1233
        %v1236 = vadd.f32 %v1224, %v1233
        %v1237 = vadd.f32 %v1225, %v1233
        %v1238 = vadd.f32 %v1226, %v1233
        %v1239 = vadd.f32 %v1227, %v1233
        %v1240 = vadd.f32 %v1228, %v1233
        %v1241 = vadd.f32 %v1229, %v1233
        %v1242 = vadd.f32 %v1230, %v1233
        %v1243 = vmax.f32 %v1235, 0.0
        %v1244 = vmax.f32 %v1236, 0.0
        %v1245 = vmax.f32 %v1237, 0.0
        %v1246 = vmax.f32 %v1238, 0.0
        %v1247 = vmax.f32 %v1239, 0.0
        %v1248 = vmax.f32 %v1240, 0.0
        %v1249 = vmax.f32 %v1241, 0.0
        %v1250 = vmax.f32 %v1242, 0.0
        %v1251 = vpack.c.bf16 %v1243, %v1243
        %v1252 = vpack.c.bf16 %v1244, %v1244
        %v1253 = vpack.c.bf16 %v1245, %v1245
        %v1254 = vpack.c.bf16 %v1246, %v1246
        %v1255 = vpack.c.bf16 %v1247, %v1247
        %v1256 = vpack.c.bf16 %v1248, %v1248
        %v1257 = vpack.c.bf16 %v1249, %v1249
        %v1258 = vpack.c.bf16 %v1250, %v1250
        %v1259 = vld [vmem:[%s4] sm:$0xf]
        %v1260 = vld [vmem:[%s4 + $0x4] sm:$0xf]
        %v1261 = vld [vmem:[%s5] sm:$0xff]
        %v1262 = vld [vmem:[%s5 + $0x8] sm:$0xff]
        %1264 = vset.pattern.permute.xlu0 0
        %1265 = vperm.xlu0 %1264, %v1261
        %v1266 = vpop.permute.xlu0 %1265
        %1269 = vset.pattern.permute.xlu0 0
        %1270 = vperm.xlu0 %1269, %v1262
        %v1271 = vpop.permute.xlu0 %1270
        %v1275 = vunpack.c.l.b16 %v1259
        %v1276 = vunpack.c.l.b16 %v1260
        %v1277 = vpack.c.b16 %v1276, %v1275
        %vm1278 = vcmask 31744
        %v1280 = vsel %vm1278, %v1277, 0
        %vm1282 = vcmask 1041408
        %v1284 = vsel %vm1282, %v1251, 0
        %v1287 = vsel %vm1282, %v1252, 0
        %v1290 = vsel %vm1282, %v1253, 0
        %v1293 = vsel %vm1282, %v1254, 0
        %v1296 = vsel %vm1282, %v1255, 0
        %v1299 = vsel %vm1282, %v1256, 0
        %v1302 = vsel %vm1282, %v1257, 0
        %v1305 = vsel %vm1282, %v1258, 0
        %1307 = vmatprep.subr.bf16.mxu0 %v1287
        %1308 = vmatpush1.bf16.msra.mxu0 %v1284
        %1309 = vmatprep.subr.bf16.mxu0 0
        %1310 = vmatpush1.bf16.msra.mxu0 0
        %1311 = vmatprep.subr.bf16.mxu0 0
        %1312 = vmatpush1.bf16.msra.mxu0 0
        %1313 = vmatprep.subr.bf16.mxu0 0
        %1314 = vmatpush1.bf16.msra.mxu0 0
        %1315 = vmatprep.subr.bf16.mxu0 0
        %1316 = vmatpush1.bf16.msra.mxu0 0
        %1317 = vmatprep.subr.bf16.mxu0 0
        %1318 = vmatpush1.bf16.msra.mxu0 0
        %1319 = vmatprep.subr.bf16.mxu0 0
        %1320 = vmatpush1.bf16.msra.mxu0 0
        %1321 = vmatprep.subr.bf16.mxu0 0
        %1322 = vmatpush1.bf16.msra.mxu0 0
        %1323 = vmatprep.subr.bf16.mxu0 0
        %1324 = vmatpush1.bf16.msra.mxu0 0
        %1325 = vmatprep.subr.bf16.mxu0 0
        %1326 = vmatpush1.bf16.msra.mxu0 0
        %1327 = vmatprep.subr.bf16.mxu0 0
        %1328 = vmatpush1.bf16.msra.mxu0 0
        %1329 = vmatprep.subr.bf16.mxu0 0
        %1330 = vmatpush1.bf16.msra.mxu0 0
        %1331 = vmatprep.subr.bf16.mxu0 0
        %1332 = vmatpush1.bf16.msra.mxu0 0
        %1333 = vmatprep.subr.bf16.mxu0 0
        %1334 = vmatpush1.bf16.msra.mxu0 0
        %1335 = vmatprep.subr.bf16.mxu0 0
        %1336 = vmatpush1.bf16.msra.mxu0 0
        %1337 = vmatprep.subr.bf16.mxu0 0
        %1338 = vmatpush1.bf16.msra.mxu0 0
        %1339 = vmatprep.mubr.bf16.mxu0 0
        %1340 = vmatmul.mubr.bf16.gmra.mrb[0].mxu0 %v1280
        %v1341 = vpop.f32.mrb[0].mxu0
        %v1342 = vadd.f32 %v1266, %v1341
        %v1343 = vpop.f32.mrb[0].mxu0
        %v1344 = vadd.f32 %v1266, %v1343
        %v1345 = vpop.f32.mrb[0].mxu0
        %v1346 = vadd.f32 %v1271, %v1345
        %v1347 = vpop.f32.mrb[0].mxu0
        %v1348 = vadd.f32 %v1271, %v1347
        %1349 = vdwg.mxu0
        %1350 = vmatprep.subr.bf16.mxu0 %v1293
        %1351 = vmatpush1.bf16.msra.mxu0 %v1290
        %1352 = vmatprep.subr.bf16.mxu0 0
        %1353 = vmatpush1.bf16.msra.mxu0 0
        %1354 = vmatprep.subr.bf16.mxu0 0
        %1355 = vmatpush1.bf16.msra.mxu0 0
        %1356 = vmatprep.subr.bf16.mxu0 0
        %1357 = vmatpush1.bf16.msra.mxu0 0
        %1358 = vmatprep.subr.bf16.mxu0 0
        %1359 = vmatpush1.bf16.msra.mxu0 0
        %1360 = vmatprep.subr.bf16.mxu0 0
        %1361 = vmatpush1.bf16.msra.mxu0 0
        %1362 = vmatprep.subr.bf16.mxu0 0
        %1363 = vmatpush1.bf16.msra.mxu0 0
        %1364 = vmatprep.subr.bf16.mxu0 0
        %1365 = vmatpush1.bf16.msra.mxu0 0
        %1366 = vmatprep.subr.bf16.mxu0 0
        %1367 = vmatpush1.bf16.msra.mxu0 0
        %1368 = vmatprep.subr.bf16.mxu0 0
        %1369 = vmatpush1.bf16.msra.mxu0 0
        %1370 = vmatprep.subr.bf16.mxu0 0
        %1371 = vmatpush1.bf16.msra.mxu0 0
        %1372 = vmatprep.subr.bf16.mxu0 0
        %1373 = vmatpush1.bf16.msra.mxu0 0
        %1374 = vmatprep.subr.bf16.mxu0 0
        %1375 = vmatpush1.bf16.msra.mxu0 0
        %1376 = vmatprep.subr.bf16.mxu0 0
        %1377 = vmatpush1.bf16.msra.mxu0 0
        %1378 = vmatprep.subr.bf16.mxu0 0
        %1379 = vmatpush1.bf16.msra.mxu0 0
        %1380 = vmatprep.subr.bf16.mxu0 0
        %1381 = vmatpush1.bf16.msra.mxu0 0
        %1382 = vmatprep.mubr.bf16.mxu0 0
        %1383 = vmatmul.mubr.bf16.gmra.mrb[0].mxu0 %v1280
        %v1384 = vpop.f32.mrb[0].mxu0
        %v1385 = vadd.f32 %v1266, %v1384
        %v1386 = vpop.f32.mrb[0].mxu0
        %v1387 = vadd.f32 %v1266, %v1386
        %v1388 = vpop.f32.mrb[0].mxu0
        %v1389 = vadd.f32 %v1271, %v1388
        %v1390 = vpop.f32.mrb[0].mxu0
        %v1391 = vadd.f32 %v1271, %v1390
        %1392 = vdwg.mxu0
        %1393 = vmatprep.subr.bf16.mxu0 %v1299
        %1394 = vmatpush1.bf16.msra.mxu0 %v1296
        %1395 = vmatprep.subr.bf16.mxu0 0
        %1396 = vmatpush1.bf16.msra.mxu0 0
        %1397 = vmatprep.subr.bf16.mxu0 0
        %1398 = vmatpush1.bf16.msra.mxu0 0
        %1399 = vmatprep.subr.bf16.mxu0 0
        %1400 = vmatpush1.bf16.msra.mxu0 0
        %1401 = vmatprep.subr.bf16.mxu0 0
        %1402 = vmatpush1.bf16.msra.mxu0 0
        %1403 = vmatprep.subr.bf16.mxu0 0
        %1404 = vmatpush1.bf16.msra.mxu0 0
        %1405 = vmatprep.subr.bf16.mxu0 0
        %1406 = vmatpush1.bf16.msra.mxu0 0
        %1407 = vmatprep.subr.bf16.mxu0 0
        %1408 = vmatpush1.bf16.msra.mxu0 0
        %1409 = vmatprep.subr.bf16.mxu0 0
        %1410 = vmatpush1.bf16.msra.mxu0 0
        %1411 = vmatprep.subr.bf16.mxu0 0
        %1412 = vmatpush1.bf16.msra.mxu0 0
        %1413 = vmatprep.subr.bf16.mxu0 0
        %1414 = vmatpush1.bf16.msra.mxu0 0
        %1415 = vmatprep.subr.bf16.mxu0 0
        %1416 = vmatpush1.bf16.msra.mxu0 0
        %1417 = vmatprep.subr.bf16.mxu0 0
        %1418 = vmatpush1.bf16.msra.mxu0 0
        %1419 = vmatprep.subr.bf16.mxu0 0
        %1420 = vmatpush1.bf16.msra.mxu0 0
        %1421 = vmatprep.subr.bf16.mxu0 0
        %1422 = vmatpush1.bf16.msra.mxu0 0
        %1423 = vmatprep.subr.bf16.mxu0 0
        %1424 = vmatpush1.bf16.msra.mxu0 0
        %1425 = vmatprep.mubr.bf16.mxu0 0
        %1426 = vmatmul.mubr.bf16.gmra.mrb[0].mxu0 %v1280
        %v1427 = vpop.f32.mrb[0].mxu0
        %v1428 = vadd.f32 %v1266, %v1427
        %v1429 = vpop.f32.mrb[0].mxu0
        %v1430 = vadd.f32 %v1266, %v1429
        %v1431 = vpop.f32.mrb[0].mxu0
        %v1432 = vadd.f32 %v1271, %v1431
        %v1433 = vpop.f32.mrb[0].mxu0
        %v1434 = vadd.f32 %v1271, %v1433
        %1435 = vdwg.mxu0
        %1436 = vmatprep.subr.bf16.mxu0 %v1305
        %1437 = vmatpush1.bf16.msra.mxu0 %v1302
        %1438 = vmatprep.subr.bf16.mxu0 0
        %1439 = vmatpush1.bf16.msra.mxu0 0
        %1440 = vmatprep.subr.bf16.mxu0 0
        %1441 = vmatpush1.bf16.msra.mxu0 0
        %1442 = vmatprep.subr.bf16.mxu0 0
        %1443 = vmatpush1.bf16.msra.mxu0 0
        %1444 = vmatprep.subr.bf16.mxu0 0
        %1445 = vmatpush1.bf16.msra.mxu0 0
        %1446 = vmatprep.subr.bf16.mxu0 0
        %1447 = vmatpush1.bf16.msra.mxu0 0
        %1448 = vmatprep.subr.bf16.mxu0 0
        %1449 = vmatpush1.bf16.msra.mxu0 0
        %1450 = vmatprep.subr.bf16.mxu0 0
        %1451 = vmatpush1.bf16.msra.mxu0 0
        %1452 = vmatprep.subr.bf16.mxu0 0
        %1453 = vmatpush1.bf16.msra.mxu0 0
        %1454 = vmatprep.subr.bf16.mxu0 0
        %1455 = vmatpush1.bf16.msra.mxu0 0
        %1456 = vmatprep.subr.bf16.mxu0 0
        %1457 = vmatpush1.bf16.msra.mxu0 0
        %1458 = vmatprep.subr.bf16.mxu0 0
        %1459 = vmatpush1.bf16.msra.mxu0 0
        %1460 = vmatprep.subr.bf16.mxu0 0
        %1461 = vmatpush1.bf16.msra.mxu0 0
        %1462 = vmatprep.subr.bf16.mxu0 0
        %1463 = vmatpush1.bf16.msra.mxu0 0
        %1464 = vmatprep.subr.bf16.mxu0 0
        %1465 = vmatpush1.bf16.msra.mxu0 0
        %1466 = vmatprep.subr.bf16.mxu0 0
        %1467 = vmatpush1.bf16.msra.mxu0 0
        %1468 = vmatprep.mubr.bf16.mxu0 0
        %1469 = vmatmul.mubr.bf16.gmra.mrb[0].mxu0 %v1280
        %v1470 = vpop.f32.mrb[0].mxu0
        %v1471 = vadd.f32 %v1266, %v1470
        %v1472 = vpop.f32.mrb[0].mxu0
        %v1473 = vadd.f32 %v1266, %v1472
        %v1474 = vpop.f32.mrb[0].mxu0
        %v1475 = vadd.f32 %v1271, %v1474
        %v1476 = vpop.f32.mrb[0].mxu0
        %v1477 = vadd.f32 %v1271, %v1476
        %1478 = vdwg.mxu0
        %v1479 = vunpack.c.l.bf16 %v271
        %v1480 = vunpack.c.h.bf16 %v271
        %v1481 = vunpack.c.l.bf16 %v272
        %v1482 = vunpack.c.h.bf16 %v272
        %v1483 = vunpack.c.l.bf16 %v273
        %v1484 = vunpack.c.h.bf16 %v273
        %v1485 = vunpack.c.l.bf16 %v274
        %v1486 = vunpack.c.h.bf16 %v274
        %v1487 = vunpack.c.l.bf16 %v275
        %v1488 = vunpack.c.h.bf16 %v275
        %v1489 = vunpack.c.l.bf16 %v276
        %v1490 = vunpack.c.h.bf16 %v276
        %v1491 = vunpack.c.l.bf16 %v277
        %v1492 = vunpack.c.h.bf16 %v277
        %v1493 = vunpack.c.l.bf16 %v278
        %v1494 = vunpack.c.h.bf16 %v278
        %v1495 = vadd.f32 %v1342, %v1479
        %v1496 = vadd.f32 %v1344, %v1480
        %v1497 = vadd.f32 %v1385, %v1481
        %v1498 = vadd.f32 %v1387, %v1482
        %v1499 = vadd.f32 %v1428, %v1483
        %v1500 = vadd.f32 %v1430, %v1484
        %v1501 = vadd.f32 %v1471, %v1485
        %v1502 = vadd.f32 %v1473, %v1486
        %v1503 = vadd.f32 %v1346, %v1487
        %v1504 = vadd.f32 %v1348, %v1488
        %v1505 = vadd.f32 %v1389, %v1489
        %v1506 = vadd.f32 %v1391, %v1490
        %v1507 = vadd.f32 %v1432, %v1491
        %v1508 = vadd.f32 %v1434, %v1492
        %v1509 = vadd.f32 %v1475, %v1493
        %v1510 = vadd.f32 %v1477, %v1494
        %v1511 = vmax.f32 %v1495, 0.0
        %v1512 = vmax.f32 %v1496, 0.0
        %v1513 = vmax.f32 %v1497, 0.0
        %v1514 = vmax.f32 %v1498, 0.0
        %v1515 = vmax.f32 %v1499, 0.0
        %v1516 = vmax.f32 %v1500, 0.0
        %v1517 = vmax.f32 %v1501, 0.0
        %v1518 = vmax.f32 %v1502, 0.0
        %v1519 = vmax.f32 %v1503, 0.0
        %v1520 = vmax.f32 %v1504, 0.0
        %v1521 = vmax.f32 %v1505, 0.0
        %v1522 = vmax.f32 %v1506, 0.0
        %v1523 = vmax.f32 %v1507, 0.0
        %v1524 = vmax.f32 %v1508, 0.0
        %v1525 = vmax.f32 %v1509, 0.0
        %v1526 = vmax.f32 %v1510, 0.0
        %1527 = vst [vmem:[%s269] sm:$0xff] %v1511
        %1528 = vst [vmem:[%s269 + $0x8] sm:$0xff] %v1512
        %1529 = vst [vmem:[%s269 + $0x10] sm:$0xff] %v1513
        %1530 = vst [vmem:[%s269 + $0x18] sm:$0xff] %v1514
        %1531 = vst [vmem:[%s269 + $0x20] sm:$0xff] %v1515
        %1532 = vst [vmem:[%s269 + $0x28] sm:$0xff] %v1516
        %1533 = vst [vmem:[%s269 + $0x30] sm:$0xff] %v1517
        %1534 = vst [vmem:[%s269 + $0x38] sm:$0xff] %v1518
        %1535 = vst [vmem:[%s269 + $0x40] sm:$0xff] %v1519
        %1536 = vst [vmem:[%s269 + $0x48] sm:$0xff] %v1520
        %1537 = vst [vmem:[%s269 + $0x50] sm:$0xff] %v1521
        %1538 = vst [vmem:[%s269 + $0x58] sm:$0xff] %v1522
        %1539 = vst [vmem:[%s269 + $0x60] sm:$0xff] %v1523
        %1540 = vst [vmem:[%s269 + $0x68] sm:$0xff] %v1524
        %1541 = vst [vmem:[%s269 + $0x70] sm:$0xff] %v1525
        %1542 = vst [vmem:[%s269 + $0x78] sm:$0xff] %v1526
        %s1543 = sand.u32 %s162, 1
        %s1544 = scalar_lea.sflag [#allocation4], %s1543
        %s1545 = sand.u32 %s162, 1
        %s1546 = smul.addr %s1545, 128
        %s1547 = scalar_lea.vmem [#allocation5], %s1546
        // Predicated region
        $region49: #{tpu_custom_call.1} parent=43 // pred_check
          %p1548 = pneg %p172
        $region50: #{tpu_custom_call.1} parent=43 // pred_check_branch
          %1550 = sbr.rel (%p1548) target = $region52
        $region51: #{tpu_custom_call.1} parent=43 // pred_region
          %s1552 = ssub.s32 2048, 2048
          %1553 = vsyncadd %s1544, %s1552
          %s1554 = smul.addr %s23, 16
          %s1555 = smul.addr %s1554, 128
          %s1556 = scalar_lea.hbm %s6, %s1555
          %s1557 = sshll.u32 %s1547, 4
          %s1558 = int_to_ptr.vmem [resolvable:$true] %s1557
          %1563 = dma.vmem_to_hbm [thread:$0]  %s1558, 2048, %s1556, %s1544, 1024, 1024, 64
        $region52: #{tpu_custom_call.1} parent=43 // pred_fallthru
          _
      $region44: #{tpu_custom_call.1} parent=5 // pred_fallthru
        _
      %p1564 = scmp.le.s32.totalorder 2, %s18
      // Predicated region
      $region53: #{tpu_custom_call.1} parent=5 // pred_check
        %p1565 = pneg %p1564
      $region54: #{tpu_custom_call.1} parent=5 // pred_check_branch
        %1567 = sbr.rel (%p1565) target = $region56
      $region55: #{tpu_custom_call.1} parent=5 // pred_region
        %s1568 = ssub.s32 %s18, 2
        // Predicated region
        $region57: #{tpu_custom_call.1} parent=55 // pred_check
          %p1569 = pneg %p178
        $region58: #{tpu_custom_call.1} parent=55 // pred_check_branch
          %1571 = sbr.rel (%p1569) target = $region60
        $region59: #{tpu_custom_call.1} parent=55 // pred_region
          %s1572 = sand.u32 %s163, 1
          %s1573 = scalar_lea.sflag [#allocation4], %s1572
          %s1574 = sand.u32 %s163, 1
          %s1575 = smul.addr %s1574, 128
          %s1576 = scalar_lea.vmem [#allocation5], %s1575
          %1577 = dma.done %s1573, 2048
        $region60: #{tpu_custom_call.1} parent=55 // pred_fallthru
          _
      $region56: #{tpu_custom_call.1} parent=5 // pred_fallthru
        _
    $region6: #{tpu_custom_call.1} parent=1 // loop_footer
      %s22 = sadd.s32 1, %s18
    $region7: #{tpu_custom_call.1} parent=1 // loop_footer_branch
      %17 = sbr.rel target = $region3
    $region8: #{tpu_custom_call.1} parent=1 // loop_exit
      _
    %1578 = vsyncpa [#allocation3], 1
    %s1579 = scalar_lea.sflag [#allocation3], 1
    %1580 = vsyncpa %s1579, 1
    %1581 = vsyncpa [#allocation4], 1
    %s1582 = scalar_lea.sflag [#allocation4], 1
    %1583 = vsyncpa %s1582, 1

</llo_original>
